<compile_context>
chip_gen: v7x
topology: tpu7x:2x2x1
jax: 0.10.0
libtpu: 0.0.40
codegen_flags: <defaults>
</compile_context>

<pallas_src>
import jax
import jax.numpy as jnp
from jax.experimental import pallas as pl
from jax.experimental.pallas import tpu as pltpu


_VMEM_SPEC = pl.BlockSpec(memory_space=pltpu.MemorySpace.VMEM)


# ---------------------------------------------------------------------------
# Fused forward kernel (all layers + residuals + final linear + log_softmax)
# ---------------------------------------------------------------------------

def _make_fused_forward_kernel(layer_cfgs):
    """Build the fused forward kernel for a static tuple of layer configs.

    layer_cfgs[i] = (heads, f_out, concat, res_out)   (res_out == 0 -> no residual)

    Ref order seen by the kernel:
      x, adj,
      per layer: w_big [F_in, heads*f_out + 2*heads (+ res_out)],
                 bias  [1, out_width],
                 (b_res [1, res_out] if res_out),
      final: w_lin [C, C], b_lin [1, C],
      out_ref [N, C].
    """
    n_params = sum(2 + (1 if res_out else 0)
                   for (_, _, _, res_out) in layer_cfgs) + 2

    def kernel(*refs):
        x_ref, adj_ref = refs[0], refs[1]
        params = refs[2:2 + n_params]
        out_ref = refs[2 + n_params]

        adj = adj_ref[...]
        # Additive softmax mask, hoisted once for all layers & heads:
        # 0 on edges, -1e30 off-graph (safe: self-loops guarantee >=1 edge/row).
        neg_mask = (adj - jnp.float32(1.0)) * jnp.float32(1e30)

        x = x_ref[...]
        p = 0
        for (heads, f_out, concat, res_out) in layer_cfgs:
            w_big = params[p][...]      # [F_in, hw + 2*heads (+ res_out)]
            bias = params[p + 1][...]   # [1, out_width]
            p += 2
            hw = heads * f_out

            # Single wide MXU push: h | alpha_dst | alpha_src | residual proj.
            big = jnp.dot(x, w_big, preferred_element_type=jnp.float32)
            h = big[:, :hw]                               # [N, heads*f_out]
            a_dst = big[:, hw:hw + heads]                 # [N, heads]
            a_src = big[:, hw + heads:hw + 2 * heads]     # [N, heads]

            # Batched attention logits for all heads: [heads, N, N]
            # e[hd, i, j] = LeakyReLU(a_dst[i, hd] + a_src[j, hd], 0.2)
            logits = a_dst.T[:, :, None] + a_src.T[:, None, :]
            logits = jnp.maximum(logits, 0.2 * logits)    # LeakyReLU(0.2)
            masked = logits + neg_mask[None, :, :]
            m = jnp.max(masked, axis=-1, keepdims=True)
            pexp = jnp.exp(masked - m)    # off-graph -> exact 0 (underflow)
            denom = jnp.sum(pexp, axis=-1, keepdims=True)
            attn = pexp * pl.reciprocal(denom, approx=True)   # [heads, N, N]

            if concat:
                # Per-head aggregation, concatenated in registers (no scratch).
                out = jnp.concatenate(
                    [jnp.dot(attn[hd], h[:, hd * f_out:(hd + 1) * f_out],
                             preferred_element_type=jnp.float32)
                     for hd in range(heads)], axis=1)
            else:
                if heads == 1:
                    out = jnp.dot(attn[0], h,
                                  preferred_element_type=jnp.float32)
                else:
                    # Head average as ONE K-concatenated matmul.
                    attn_wide = jnp.concatenate(
                        [attn[hd] for hd in range(heads)], axis=1)  # [N, h*N]
                    hh_stack = jnp.concatenate(
                        [h[:, hd * f_out:(hd + 1) * f_out]
                         for hd in range(heads)], axis=0)           # [h*N, f]
                    out = jnp.dot(attn_wide, hh_stack,
                                  preferred_element_type=jnp.float32)
                    out = out * jnp.float32(1.0 / heads)

            # bias + (no-op BatchNorm in eval) + fused ReLU (every layer)
            out = jnp.maximum(out + bias, 0.0)
            if res_out:
                b_res = params[p][...]
                p += 1
                # residual projection computed inside `big`, added AFTER ReLU
                res_proj = big[:, hw + 2 * heads:hw + 2 * heads + res_out]
                out = out + res_proj + b_res
            x = out
            # dropout: identity in eval mode

        # Final Linear + log_softmax(dim=1) (exact)
        w_lin = params[p][...]
        b_lin = params[p + 1][...]
        y = jnp.dot(x, w_lin, preferred_element_type=jnp.float32) + b_lin
        m = jnp.max(y, axis=1, keepdims=True)
        lse = m + jnp.log(jnp.sum(jnp.exp(y - m), axis=1, keepdims=True))
        out_ref[...] = y - lse

    return kernel, n_params


# ---------------------------------------------------------------------------
# Wrapper: single pallas_call for the whole forward (everything in VMEM)
# ---------------------------------------------------------------------------

def gatnet2_forward(params, x, adj):
    convs = params["convs"]
    layer_cfgs = tuple((c["heads"], c["f_out"], c["concat"], c["res_out"])
                       for c in convs)
    kernel, n_params = _make_fused_forward_kernel(layer_cfgs)

    flat = [x, adj]
    for c in convs:
        flat += [c["w_big"], c["bias"]]
        if c["res_out"]:
            flat.append(c["b_res"])
    flat += [params["linear"]["w"], params["linear"]["b"]]
    assert len(flat) == 2 + n_params

    n = x.shape[0]
    out_dim = params["linear"]["w"].shape[1]

    return pl.pallas_call(
        kernel,
        out_shape=jax.ShapeDtypeStruct((n, out_dim), jnp.float32),
        in_specs=[_VMEM_SPEC] * len(flat),
        out_specs=_VMEM_SPEC,
    )(*flat)


# ---------------------------------------------------------------------------
# Deterministic parameter init (shapes from GATNet2.__init__), with the
# attention vectors and residual projection folded into W_big at init time.
# ---------------------------------------------------------------------------

def init_params(key, in_ch, hidden, out_ch, heads, num_layers):
    params = {"convs": []}
    for i in range(num_layers):
        in_hidden = in_ch if i == 0 else hidden * heads
        out_hidden = hidden if i < num_layers - 1 else out_ch
        h_i = heads if i < num_layers - 1 else 1
        concat = i < num_layers - 1
        key, k1, k2, k3, k4 = jax.random.split(key, 5)
        # PyG GATConv: lin weight [h*out, in] -> store transposed [in, h*out]
        w_t = jax.random.normal(k1, (in_hidden, h_i * out_hidden), jnp.float32) * 0.1
        a_src = jax.random.normal(k2, (h_i, out_hidden), jnp.float32) * 0.1
        a_dst = jax.random.normal(k3, (h_i, out_hidden), jnp.float32) * 0.1
        bias_dim = h_i * out_hidden if concat else out_hidden
        bias = jax.random.normal(k4, (1, bias_dim), jnp.float32) * 0.1

        # Fold attention vectors: wa_*[:, hd] = W[:, hd-block] @ a_*[hd]
        w3 = w_t.reshape(in_hidden, h_i, out_hidden)
        wa_src = jnp.einsum("iho,ho->ih", w3, a_src)   # [in_hidden, h_i]
        wa_dst = jnp.einsum("iho,ho->ih", w3, a_dst)   # [in_hidden, h_i]

        cols = [w_t, wa_dst, wa_src]
        res_out = 0
        b_res = None
        if i > 0:
            res_out = out_hidden * h_i if concat else out_ch
            key, k5, k6 = jax.random.split(key, 3)
            wr_t = jax.random.normal(k5, (in_hidden, res_out), jnp.float32) * 0.1
            b_res = jax.random.normal(k6, (1, res_out), jnp.float32) * 0.1
            cols.append(wr_t)

        w_big = jnp.concatenate(cols, axis=1)
        params["convs"].append(dict(
            w_big=w_big, bias=bias, b_res=b_res,
            heads=h_i, f_out=out_hidden, concat=concat, res_out=res_out))

    key, k7, k8 = jax.random.split(key, 3)
    params["linear"] = dict(
        w=jax.random.normal(k7, (out_ch, out_ch), jnp.float32) * 0.1,
        b=jax.random.normal(k8, (1, out_ch), jnp.float32) * 0.1,
    )
    return params


# ---------------------------------------------------------------------------

if __name__ == "__main__":
    N, E = 16, 40
    in_ch, hidden, out_ch, heads, num_layers = 16, 8, 8, 2, 3

    key = jax.random.PRNGKey(0)
    key, kx, ks, kd = jax.random.split(key, 4)
    x = jax.random.normal(kx, (N, in_ch), jnp.float32)

    # edge_index in PyG convention: row 0 = source, row 1 = destination
    src = jax.random.randint(ks, (E,), 0, N)
    dst = jax.random.randint(kd, (E,), 0, N)
    edge_index = jnp.stack([src, dst])  # [2, E]

    # dense adjacency with self loops (GATConv add_self_loops=True default);
    # edge/feature dropout is identity in eval mode.
    adj = jnp.zeros((N, N), jnp.float32).at[edge_index[1], edge_index[0]].set(1.0)
    adj = adj.at[jnp.arange(N), jnp.arange(N)].set(1.0)

    params = init_params(key, in_ch, hidden, out_ch, heads, num_layers)

    out = gatnet2_forward(params, x, adj)
    out = jax.block_until_ready(out)

    assert out.shape == (N, out_ch), out.shape
    assert bool(jnp.all(jnp.isfinite(out)))
    # log_softmax rows should (exp-)sum to ~1 (final softmax is exact)
    assert bool(jnp.allclose(jnp.sum(jnp.exp(out), axis=1), 1.0, atol=1e-4))
    print("KERNEL_OK")
</pallas_src>

<mosaic_0001>
module attributes {stable_mosaic.version = 11 : i64} {
  func.func @kernel(%arg0: memref<16x16xf32, #tpu.memory_space<vmem>>, %arg1: memref<16x16xf32, #tpu.memory_space<vmem>>, %arg2: memref<16x20xf32, #tpu.memory_space<vmem>>, %arg3: memref<1x16xf32, #tpu.memory_space<vmem>>, %arg4: memref<16x36xf32, #tpu.memory_space<vmem>>, %arg5: memref<1x16xf32, #tpu.memory_space<vmem>>, %arg6: memref<1x16xf32, #tpu.memory_space<vmem>>, %arg7: memref<16x18xf32, #tpu.memory_space<vmem>>, %arg8: memref<1x8xf32, #tpu.memory_space<vmem>>, %arg9: memref<1x8xf32, #tpu.memory_space<vmem>>, %arg10: memref<8x8xf32, #tpu.memory_space<vmem>>, %arg11: memref<1x8xf32, #tpu.memory_space<vmem>>, %arg12: memref<16x8xf32, #tpu.memory_space<vmem>>) attributes {dimension_semantics = [], scalar_prefetch = 0 : i64, scratch_operands = 0 : i64, tpu.core_type = #tpu.core_type<tc>} {
    %c0 = arith.constant 0 : index
    %c0_0 = arith.constant 0 : index
    %0 = vector.load %arg1[%c0, %c0_0] : memref<16x16xf32, #tpu.memory_space<vmem>>, vector<16x16xf32>
    %cst = arith.constant 1.000000e+00 : f32
    %1 = vector.broadcast %cst : f32 to vector<16x16xf32>
    %2 = arith.subf %0, %1 : vector<16x16xf32>
    %cst_1 = arith.constant 1.000000e+30 : f32
    %3 = vector.broadcast %cst_1 : f32 to vector<16x16xf32>
    %4 = arith.mulf %2, %3 : vector<16x16xf32>
    %c0_2 = arith.constant 0 : index
    %c0_3 = arith.constant 0 : index
    %5 = vector.load %arg0[%c0_2, %c0_3] : memref<16x16xf32, #tpu.memory_space<vmem>>, vector<16x16xf32>
    %c0_4 = arith.constant 0 : index
    %c0_5 = arith.constant 0 : index
    %6 = vector.load %arg2[%c0_4, %c0_5] : memref<16x20xf32, #tpu.memory_space<vmem>>, vector<16x20xf32>
    %c0_6 = arith.constant 0 : index
    %c0_7 = arith.constant 0 : index
    %7 = vector.load %arg3[%c0_6, %c0_7] : memref<1x16xf32, #tpu.memory_space<vmem>>, vector<1x16xf32>
    %cst_8 = arith.constant dense<0.000000e+00> : vector<16x20xf32>
    %8 = tpu.matmul %5, %6, %cst_8 {dimension_numbers = #tpu.dot_dimension_numbers<[1], [0], [0], [1], [0, 0, 1, 1], [], []>} : vector<16x16xf32>, vector<16x20xf32>, vector<16x20xf32> -> vector<16x20xf32>
    %9 = vector.extract_strided_slice %8 {offsets = [0, 0], sizes = [16, 16], strides = [1, 1]} : vector<16x20xf32> to vector<16x16xf32>
    %10 = vector.extract_strided_slice %8 {offsets = [0, 16], sizes = [16, 2], strides = [1, 1]} : vector<16x20xf32> to vector<16x2xf32>
    %11 = vector.extract_strided_slice %8 {offsets = [0, 18], sizes = [16, 2], strides = [1, 1]} : vector<16x20xf32> to vector<16x2xf32>
    %12 = tpu.transpose %10, [1, 0] : vector<16x2xf32> -> vector<2x16xf32>
    %13 = vector.shape_cast %12 : vector<2x16xf32> to vector<2x16x1xf32>
    %14 = tpu.transpose %11, [1, 0] : vector<16x2xf32> -> vector<2x16xf32>
    %15 = vector.shape_cast %14 : vector<2x16xf32> to vector<2x1x16xf32>
    %16 = vector.broadcast %13 : vector<2x16x1xf32> to vector<2x16x16xf32>
    %17 = vector.broadcast %15 : vector<2x1x16xf32> to vector<2x16x16xf32>
    %18 = arith.addf %16, %17 : vector<2x16x16xf32>
    %cst_9 = arith.constant 2.000000e-01 : f32
    %19 = vector.broadcast %cst_9 : f32 to vector<2x16x16xf32>
    %20 = arith.mulf %19, %18 : vector<2x16x16xf32>
    %21 = arith.maximumf %18, %20 : vector<2x16x16xf32>
    %22 = vector.shape_cast %4 : vector<16x16xf32> to vector<1x16x16xf32>
    %23 = vector.broadcast %22 : vector<1x16x16xf32> to vector<2x16x16xf32>
    %24 = arith.addf %21, %23 : vector<2x16x16xf32>
    %cst_10 = arith.constant dense<0xFF800000> : vector<2x16xf32>
    %25 = vector.multi_reduction <maximumf>, %24, %cst_10 [2] : vector<2x16x16xf32> to vector<2x16xf32>
    %26 = vector.shape_cast %25 : vector<2x16xf32> to vector<2x16x1xf32>
    %27 = vector.broadcast %26 : vector<2x16x1xf32> to vector<2x16x16xf32>
    %28 = arith.subf %24, %27 : vector<2x16x16xf32>
    %29 = math.exp %28 : vector<2x16x16xf32>
    %cst_11 = arith.constant dense<0.000000e+00> : vector<2x16xf32>
    %30 = vector.multi_reduction <add>, %29, %cst_11 [2] : vector<2x16x16xf32> to vector<2x16xf32>
    %31 = vector.shape_cast %30 : vector<2x16xf32> to vector<2x16x1xf32>
    %32 = tpu.reciprocal %31 {approx = true} : vector<2x16x1xf32> -> vector<2x16x1xf32>
    %33 = vector.broadcast %32 : vector<2x16x1xf32> to vector<2x16x16xf32>
    %34 = arith.mulf %29, %33 : vector<2x16x16xf32>
    %35 = vector.extract_strided_slice %34 {offsets = [0, 0, 0], sizes = [1, 16, 16], strides = [1, 1, 1]} : vector<2x16x16xf32> to vector<1x16x16xf32>
    %36 = vector.shape_cast %35 : vector<1x16x16xf32> to vector<16x16xf32>
    %37 = vector.extract_strided_slice %9 {offsets = [0, 0], sizes = [16, 8], strides = [1, 1]} : vector<16x16xf32> to vector<16x8xf32>
    %cst_12 = arith.constant dense<0.000000e+00> : vector<16x8xf32>
    %38 = tpu.matmul %36, %37, %cst_12 {dimension_numbers = #tpu.dot_dimension_numbers<[1], [0], [0], [1], [0, 0, 1, 1], [], []>} : vector<16x16xf32>, vector<16x8xf32>, vector<16x8xf32> -> vector<16x8xf32>
    %39 = vector.extract_strided_slice %34 {offsets = [1, 0, 0], sizes = [1, 16, 16], strides = [1, 1, 1]} : vector<2x16x16xf32> to vector<1x16x16xf32>
    %40 = vector.shape_cast %39 : vector<1x16x16xf32> to vector<16x16xf32>
    %41 = vector.extract_strided_slice %9 {offsets = [0, 8], sizes = [16, 8], strides = [1, 1]} : vector<16x16xf32> to vector<16x8xf32>
    %cst_13 = arith.constant dense<0.000000e+00> : vector<16x8xf32>
    %42 = tpu.matmul %40, %41, %cst_13 {dimension_numbers = #tpu.dot_dimension_numbers<[1], [0], [0], [1], [0, 0, 1, 1], [], []>} : vector<16x16xf32>, vector<16x8xf32>, vector<16x8xf32> -> vector<16x8xf32>
    %43 = tpu.concatenate %38, %42 in 1 : vector<16x8xf32>, vector<16x8xf32> -> vector<16x16xf32>
    %44 = vector.broadcast %7 : vector<1x16xf32> to vector<16x16xf32>
    %45 = arith.addf %43, %44 : vector<16x16xf32>
    %cst_14 = arith.constant 0.000000e+00 : f32
    %46 = vector.broadcast %cst_14 : f32 to vector<16x16xf32>
    %47 = arith.maximumf %45, %46 : vector<16x16xf32>
    %c0_15 = arith.constant 0 : index
    %c0_16 = arith.constant 0 : index
    %48 = vector.load %arg4[%c0_15, %c0_16] : memref<16x36xf32, #tpu.memory_space<vmem>>, vector<16x36xf32>
    %c0_17 = arith.constant 0 : index
    %c0_18 = arith.constant 0 : index
    %49 = vector.load %arg5[%c0_17, %c0_18] : memref<1x16xf32, #tpu.memory_space<vmem>>, vector<1x16xf32>
    %cst_19 = arith.constant dense<0.000000e+00> : vector<16x36xf32>
    %50 = tpu.matmul %47, %48, %cst_19 {dimension_numbers = #tpu.dot_dimension_numbers<[1], [0], [0], [1], [0, 0, 1, 1], [], []>} : vector<16x16xf32>, vector<16x36xf32>, vector<16x36xf32> -> vector<16x36xf32>
    %51 = vector.extract_strided_slice %50 {offsets = [0, 0], sizes = [16, 16], strides = [1, 1]} : vector<16x36xf32> to vector<16x16xf32>
    %52 = vector.extract_strided_slice %50 {offsets = [0, 16], sizes = [16, 2], strides = [1, 1]} : vector<16x36xf32> to vector<16x2xf32>
    %53 = vector.extract_strided_slice %50 {offsets = [0, 18], sizes = [16, 2], strides = [1, 1]} : vector<16x36xf32> to vector<16x2xf32>
    %54 = tpu.transpose %52, [1, 0] : vector<16x2xf32> -> vector<2x16xf32>
    %55 = vector.shape_cast %54 : vector<2x16xf32> to vector<2x16x1xf32>
    %56 = tpu.transpose %53, [1, 0] : vector<16x2xf32> -> vector<2x16xf32>
    %57 = vector.shape_cast %56 : vector<2x16xf32> to vector<2x1x16xf32>
    %58 = vector.broadcast %55 : vector<2x16x1xf32> to vector<2x16x16xf32>
    %59 = vector.broadcast %57 : vector<2x1x16xf32> to vector<2x16x16xf32>
    %60 = arith.addf %58, %59 : vector<2x16x16xf32>
    %cst_20 = arith.constant 2.000000e-01 : f32
    %61 = vector.broadcast %cst_20 : f32 to vector<2x16x16xf32>
    %62 = arith.mulf %61, %60 : vector<2x16x16xf32>
    %63 = arith.maximumf %60, %62 : vector<2x16x16xf32>
    %64 = vector.shape_cast %4 : vector<16x16xf32> to vector<1x16x16xf32>
    %65 = vector.broadcast %64 : vector<1x16x16xf32> to vector<2x16x16xf32>
    %66 = arith.addf %63, %65 : vector<2x16x16xf32>
    %cst_21 = arith.constant dense<0xFF800000> : vector<2x16xf32>
    %67 = vector.multi_reduction <maximumf>, %66, %cst_21 [2] : vector<2x16x16xf32> to vector<2x16xf32>
    %68 = vector.shape_cast %67 : vector<2x16xf32> to vector<2x16x1xf32>
    %69 = vector.broadcast %68 : vector<2x16x1xf32> to vector<2x16x16xf32>
    %70 = arith.subf %66, %69 : vector<2x16x16xf32>
    %71 = math.exp %70 : vector<2x16x16xf32>
    %cst_22 = arith.constant dense<0.000000e+00> : vector<2x16xf32>
    %72 = vector.multi_reduction <add>, %71, %cst_22 [2] : vector<2x16x16xf32> to vector<2x16xf32>
    %73 = vector.shape_cast %72 : vector<2x16xf32> to vector<2x16x1xf32>
    %74 = tpu.reciprocal %73 {approx = true} : vector<2x16x1xf32> -> vector<2x16x1xf32>
    %75 = vector.broadcast %74 : vector<2x16x1xf32> to vector<2x16x16xf32>
    %76 = arith.mulf %71, %75 : vector<2x16x16xf32>
    %77 = vector.extract_strided_slice %76 {offsets = [0, 0, 0], sizes = [1, 16, 16], strides = [1, 1, 1]} : vector<2x16x16xf32> to vector<1x16x16xf32>
    %78 = vector.shape_cast %77 : vector<1x16x16xf32> to vector<16x16xf32>
    %79 = vector.extract_strided_slice %51 {offsets = [0, 0], sizes = [16, 8], strides = [1, 1]} : vector<16x16xf32> to vector<16x8xf32>
    %cst_23 = arith.constant dense<0.000000e+00> : vector<16x8xf32>
    %80 = tpu.matmul %78, %79, %cst_23 {dimension_numbers = #tpu.dot_dimension_numbers<[1], [0], [0], [1], [0, 0, 1, 1], [], []>} : vector<16x16xf32>, vector<16x8xf32>, vector<16x8xf32> -> vector<16x8xf32>
    %81 = vector.extract_strided_slice %76 {offsets = [1, 0, 0], sizes = [1, 16, 16], strides = [1, 1, 1]} : vector<2x16x16xf32> to vector<1x16x16xf32>
    %82 = vector.shape_cast %81 : vector<1x16x16xf32> to vector<16x16xf32>
    %83 = vector.extract_strided_slice %51 {offsets = [0, 8], sizes = [16, 8], strides = [1, 1]} : vector<16x16xf32> to vector<16x8xf32>
    %cst_24 = arith.constant dense<0.000000e+00> : vector<16x8xf32>
    %84 = tpu.matmul %82, %83, %cst_24 {dimension_numbers = #tpu.dot_dimension_numbers<[1], [0], [0], [1], [0, 0, 1, 1], [], []>} : vector<16x16xf32>, vector<16x8xf32>, vector<16x8xf32> -> vector<16x8xf32>
    %85 = tpu.concatenate %80, %84 in 1 : vector<16x8xf32>, vector<16x8xf32> -> vector<16x16xf32>
    %86 = vector.broadcast %49 : vector<1x16xf32> to vector<16x16xf32>
    %87 = arith.addf %85, %86 : vector<16x16xf32>
    %cst_25 = arith.constant 0.000000e+00 : f32
    %88 = vector.broadcast %cst_25 : f32 to vector<16x16xf32>
    %89 = arith.maximumf %87, %88 : vector<16x16xf32>
    %c0_26 = arith.constant 0 : index
    %c0_27 = arith.constant 0 : index
    %90 = vector.load %arg6[%c0_26, %c0_27] : memref<1x16xf32, #tpu.memory_space<vmem>>, vector<1x16xf32>
    %91 = vector.extract_strided_slice %50 {offsets = [0, 20], sizes = [16, 16], strides = [1, 1]} : vector<16x36xf32> to vector<16x16xf32>
    %92 = arith.addf %89, %91 : vector<16x16xf32>
    %93 = vector.broadcast %90 : vector<1x16xf32> to vector<16x16xf32>
    %94 = arith.addf %92, %93 : vector<16x16xf32>
    %c0_28 = arith.constant 0 : index
    %c0_29 = arith.constant 0 : index
    %95 = vector.load %arg7[%c0_28, %c0_29] : memref<16x18xf32, #tpu.memory_space<vmem>>, vector<16x18xf32>
    %c0_30 = arith.constant 0 : index
    %c0_31 = arith.constant 0 : index
    %96 = vector.load %arg8[%c0_30, %c0_31] : memref<1x8xf32, #tpu.memory_space<vmem>>, vector<1x8xf32>
    %cst_32 = arith.constant dense<0.000000e+00> : vector<16x18xf32>
    %97 = tpu.matmul %94, %95, %cst_32 {dimension_numbers = #tpu.dot_dimension_numbers<[1], [0], [0], [1], [0, 0, 1, 1], [], []>} : vector<16x16xf32>, vector<16x18xf32>, vector<16x18xf32> -> vector<16x18xf32>
    %98 = vector.extract_strided_slice %97 {offsets = [0, 0], sizes = [16, 8], strides = [1, 1]} : vector<16x18xf32> to vector<16x8xf32>
    %99 = vector.extract_strided_slice %97 {offsets = [0, 8], sizes = [16, 1], strides = [1, 1]} : vector<16x18xf32> to vector<16x1xf32>
    %100 = vector.extract_strided_slice %97 {offsets = [0, 9], sizes = [16, 1], strides = [1, 1]} : vector<16x18xf32> to vector<16x1xf32>
    %101 = tpu.transpose %99, [1, 0] : vector<16x1xf32> -> vector<1x16xf32>
    %102 = vector.shape_cast %101 : vector<1x16xf32> to vector<1x16x1xf32>
    %103 = tpu.transpose %100, [1, 0] : vector<16x1xf32> -> vector<1x16xf32>
    %104 = vector.shape_cast %103 : vector<1x16xf32> to vector<1x1x16xf32>
    %105 = vector.broadcast %102 : vector<1x16x1xf32> to vector<1x16x16xf32>
    %106 = vector.broadcast %104 : vector<1x1x16xf32> to vector<1x16x16xf32>
    %107 = arith.addf %105, %106 : vector<1x16x16xf32>
    %cst_33 = arith.constant 2.000000e-01 : f32
    %108 = vector.broadcast %cst_33 : f32 to vector<1x16x16xf32>
    %109 = arith.mulf %108, %107 : vector<1x16x16xf32>
    %110 = arith.maximumf %107, %109 : vector<1x16x16xf32>
    %111 = vector.shape_cast %4 : vector<16x16xf32> to vector<1x16x16xf32>
    %112 = arith.addf %110, %111 : vector<1x16x16xf32>
    %cst_34 = arith.constant dense<0xFF800000> : vector<1x16xf32>
    %113 = vector.multi_reduction <maximumf>, %112, %cst_34 [2] : vector<1x16x16xf32> to vector<1x16xf32>
    %114 = vector.shape_cast %113 : vector<1x16xf32> to vector<1x16x1xf32>
    %115 = vector.broadcast %114 : vector<1x16x1xf32> to vector<1x16x16xf32>
    %116 = arith.subf %112, %115 : vector<1x16x16xf32>
    %117 = math.exp %116 : vector<1x16x16xf32>
    %cst_35 = arith.constant dense<0.000000e+00> : vector<1x16xf32>
    %118 = vector.multi_reduction <add>, %117, %cst_35 [2] : vector<1x16x16xf32> to vector<1x16xf32>
    %119 = vector.shape_cast %118 : vector<1x16xf32> to vector<1x16x1xf32>
    %120 = tpu.reciprocal %119 {approx = true} : vector<1x16x1xf32> -> vector<1x16x1xf32>
    %121 = vector.broadcast %120 : vector<1x16x1xf32> to vector<1x16x16xf32>
    %122 = arith.mulf %117, %121 : vector<1x16x16xf32>
    %123 = vector.shape_cast %122 : vector<1x16x16xf32> to vector<16x16xf32>
    %cst_36 = arith.constant dense<0.000000e+00> : vector<16x8xf32>
    %124 = tpu.matmul %123, %98, %cst_36 {dimension_numbers = #tpu.dot_dimension_numbers<[1], [0], [0], [1], [0, 0, 1, 1], [], []>} : vector<16x16xf32>, vector<16x8xf32>, vector<16x8xf32> -> vector<16x8xf32>
    %125 = vector.broadcast %96 : vector<1x8xf32> to vector<16x8xf32>
    %126 = arith.addf %124, %125 : vector<16x8xf32>
    %cst_37 = arith.constant 0.000000e+00 : f32
    %127 = vector.broadcast %cst_37 : f32 to vector<16x8xf32>
    %128 = arith.maximumf %126, %127 : vector<16x8xf32>
    %c0_38 = arith.constant 0 : index
    %c0_39 = arith.constant 0 : index
    %129 = vector.load %arg9[%c0_38, %c0_39] : memref<1x8xf32, #tpu.memory_space<vmem>>, vector<1x8xf32>
    %130 = vector.extract_strided_slice %97 {offsets = [0, 10], sizes = [16, 8], strides = [1, 1]} : vector<16x18xf32> to vector<16x8xf32>
    %131 = arith.addf %128, %130 : vector<16x8xf32>
    %132 = vector.broadcast %129 : vector<1x8xf32> to vector<16x8xf32>
    %133 = arith.addf %131, %132 : vector<16x8xf32>
    %c0_40 = arith.constant 0 : index
    %c0_41 = arith.constant 0 : index
    %134 = vector.load %arg10[%c0_40, %c0_41] : memref<8x8xf32, #tpu.memory_space<vmem>>, vector<8x8xf32>
    %c0_42 = arith.constant 0 : index
    %c0_43 = arith.constant 0 : index
    %135 = vector.load %arg11[%c0_42, %c0_43] : memref<1x8xf32, #tpu.memory_space<vmem>>, vector<1x8xf32>
    %cst_44 = arith.constant dense<0.000000e+00> : vector<16x8xf32>
    %136 = tpu.matmul %133, %134, %cst_44 {dimension_numbers = #tpu.dot_dimension_numbers<[1], [0], [0], [1], [0, 0, 1, 1], [], []>} : vector<16x8xf32>, vector<8x8xf32>, vector<16x8xf32> -> vector<16x8xf32>
    %137 = vector.broadcast %135 : vector<1x8xf32> to vector<16x8xf32>
    %138 = arith.addf %136, %137 : vector<16x8xf32>
    %cst_45 = arith.constant dense<0xFF800000> : vector<16xf32>
    %139 = vector.multi_reduction <maximumf>, %138, %cst_45 [1] : vector<16x8xf32> to vector<16xf32>
    %140 = vector.shape_cast %139 : vector<16xf32> to vector<16x1xf32>
    %141 = vector.broadcast %140 : vector<16x1xf32> to vector<16x8xf32>
    %142 = arith.subf %138, %141 : vector<16x8xf32>
    %143 = math.exp %142 : vector<16x8xf32>
    %cst_46 = arith.constant dense<0.000000e+00> : vector<16xf32>
    %144 = vector.multi_reduction <add>, %143, %cst_46 [1] : vector<16x8xf32> to vector<16xf32>
    %145 = vector.shape_cast %144 : vector<16xf32> to vector<16x1xf32>
    %146 = math.log %145 : vector<16x1xf32>
    %147 = arith.addf %140, %146 : vector<16x1xf32>
    %148 = vector.broadcast %147 : vector<16x1xf32> to vector<16x8xf32>
    %149 = arith.subf %138, %148 : vector<16x8xf32>
    %c0_47 = arith.constant 0 : index
    %c0_48 = arith.constant 0 : index
    %150 = vector.load %arg12[%c0_47, %c0_48] : memref<16x8xf32, #tpu.memory_space<vmem>>, vector<16x8xf32>
    tpu.vector_store %arg12[%c0_47, %c0_48], %149 {strides = array<i32>} : memref<16x8xf32, #tpu.memory_space<vmem>>, vector<16x8xf32>,
    return
  }
}

</mosaic_0001>

<llo_original>
// kernel: tpu_custom_call.1
$region0: #{tpu_custom_call.1}
  #allocation0 [shape = 'u32[]', space=smem, size = 0x4, offset = 0x4, fixed_abs, tag = 'smem constant byte address 0x4 - core index']
  #allocation1 [shape = 'u32[144,128]{1,0:T(1,128)}', space=vmem, size = 0x12000, scoped, tag = 'internal scratch']
  %s0 = inlined_call_operand.hbm [shape: f32[16,16], index: 0, kind: input, shape index: {}]
  %s1 = inlined_call_operand.hbm [shape: f32[16,16], index: 1, kind: input, shape index: {}]
  %s2 = inlined_call_operand.hbm [shape: f32[16,20], index: 2, kind: input, shape index: {}]
  %s3 = inlined_call_operand.vmem [shape: f32[1,16], index: 3, kind: input, shape index: {}]
  %s4 = inlined_call_operand.hbm [shape: f32[16,36], index: 4, kind: input, shape index: {}]
  %s5 = inlined_call_operand.vmem [shape: f32[1,16], index: 5, kind: input, shape index: {}]
  %s6 = inlined_call_operand.hbm [shape: f32[1,16], index: 6, kind: input, shape index: {}]
  %s7 = inlined_call_operand.vmem [shape: f32[16,18], index: 7, kind: input, shape index: {}]
  %s8 = inlined_call_operand.vmem [shape: f32[1,8], index: 8, kind: input, shape index: {}]
  %s9 = inlined_call_operand.vmem [shape: f32[1,8], index: 9, kind: input, shape index: {}]
  %s10 = inlined_call_operand.vmem [shape: f32[8,8], index: 10, kind: input, shape index: {}]
  %s11 = inlined_call_operand.vmem [shape: f32[1,8], index: 11, kind: input, shape index: {}]
  %s12 = inlined_call_operand.vmem [shape: f32[16,8], index: 12, kind: output, shape index: {}]
  %s13 = sld [smem:[#allocation0]]
  $region78: #{tpu_custom_call.1} parent=0
    _
  %s15 = ssub.s32 1, %s13
  %s16 = scalar_select 0, %s15, %s13
  $region1: #{tpu_custom_call.1} parent=0
    #allocation2 [shape = 'u8[8192]{0}', space=vmem, size = 0x2000, scoped, tag = 'input window, operand 0, single buffered']
    #allocation3 [shape = 's32[1]{0}', space=sflag, size = 0x4, scoped, tag = 'scoped memory for tpu_custom_call.1']
    #allocation4 [shape = 'u8[8192]{0}', space=vmem, size = 0x2000, scoped, tag = 'input window, operand 1, single buffered']
    #allocation5 [shape = 's32[1]{0}', space=sflag, size = 0x4, scoped, tag = 'scoped memory for tpu_custom_call.1']
    #allocation6 [shape = 'u8[8192]{0}', space=vmem, size = 0x2000, scoped, tag = 'input window, operand 2, single buffered']
    #allocation7 [shape = 'u8[8192]{0}', space=vmem, size = 0x2000, scoped, tag = 'input window, operand 4, single buffered']
    #allocation8 [shape = 's32[1]{0}', space=sflag, size = 0x4, scoped, tag = 'scoped memory for tpu_custom_call.1']
    #allocation9 [shape = 'u8[512]{0}', space=vmem, size = 0x400, scoped, tag = 'input window, operand 6, single buffered']
    %17 = vsyncpa [#allocation3], 0
    %18 = vsyncpa [#allocation5], 0
    %19 = vsyncpa [#allocation8], 0
    // Predicated region
    $region2: #{tpu_custom_call.1} parent=1 // pred_check
      _
    $region3: #{tpu_custom_call.1} parent=1 // pred_check_branch
      %21 = sbr.rel (0) target = $region5
    $region4: #{tpu_custom_call.1} parent=1 // pred_region
      %s23 = ssub.s32 256, 256
      %24 = vsyncadd [#allocation3], %s23
      %s25 = sshll.u32 [#allocation2], 4
      %s26 = int_to_ptr.vmem [resolvable:$true] %s25
      %31 = dma.hbm_to_vmem [thread:$0]  %s0, 256, %s26, [#allocation3], 128, 128, 8
    $region5: #{tpu_custom_call.1} parent=1 // pred_fallthru
      _
    // Predicated region
    $region6: #{tpu_custom_call.1} parent=1 // pred_check
      _
    $region7: #{tpu_custom_call.1} parent=1 // pred_check_branch
      %33 = sbr.rel (0) target = $region9
    $region8: #{tpu_custom_call.1} parent=1 // pred_region
      %s35 = ssub.s32 256, 256
      %36 = vsyncadd [#allocation5], %s35
      %s37 = sshll.u32 [#allocation4], 4
      %s38 = int_to_ptr.vmem [resolvable:$true] %s37
      %43 = dma.hbm_to_vmem [thread:$0]  %s1, 256, %s38, [#allocation5], 128, 128, 8
    $region9: #{tpu_custom_call.1} parent=1 // pred_fallthru
      _
    // Predicated region
    $region10: #{tpu_custom_call.1} parent=1 // pred_check
      _
    $region11: #{tpu_custom_call.1} parent=1 // pred_check_branch
      %45 = sbr.rel (0) target = $region13
    $region12: #{tpu_custom_call.1} parent=1 // pred_region
      %s47 = ssub.s32 256, 256
      %48 = vsyncadd [#allocation5], %s47
      %s49 = sshll.u32 [#allocation6], 4
      %s50 = int_to_ptr.vmem [resolvable:$true] %s49
      %55 = dma.hbm_to_vmem [thread:$0]  %s2, 256, %s50, [#allocation5], 128, 128, 8
    $region13: #{tpu_custom_call.1} parent=1 // pred_fallthru
      _
    // Predicated region
    $region14: #{tpu_custom_call.1} parent=1 // pred_check
      _
    $region15: #{tpu_custom_call.1} parent=1 // pred_check_branch
      %57 = sbr.rel (0) target = $region17
    $region16: #{tpu_custom_call.1} parent=1 // pred_region
      _
    $region17: #{tpu_custom_call.1} parent=1 // pred_fallthru
      _
    // Predicated region
    $region18: #{tpu_custom_call.1} parent=1 // pred_check
      _
    $region19: #{tpu_custom_call.1} parent=1 // pred_check_branch
      %59 = sbr.rel (0) target = $region21
    $region20: #{tpu_custom_call.1} parent=1 // pred_region
      %s61 = ssub.s32 256, 256
      %62 = vsyncadd [#allocation8], %s61
      %s63 = sshll.u32 [#allocation7], 4
      %s64 = int_to_ptr.vmem [resolvable:$true] %s63
      %69 = dma.hbm_to_vmem [thread:$0]  %s4, 256, %s64, [#allocation8], 128, 128, 8
    $region21: #{tpu_custom_call.1} parent=1 // pred_fallthru
      _
    // Predicated region
    $region22: #{tpu_custom_call.1} parent=1 // pred_check
      _
    $region23: #{tpu_custom_call.1} parent=1 // pred_check_branch
      %71 = sbr.rel (0) target = $region25
    $region24: #{tpu_custom_call.1} parent=1 // pred_region
      _
    $region25: #{tpu_custom_call.1} parent=1 // pred_fallthru
      _
    // Predicated region
    $region26: #{tpu_custom_call.1} parent=1 // pred_check
      _
    $region27: #{tpu_custom_call.1} parent=1 // pred_check_branch
      %73 = sbr.rel (0) target = $region29
    $region28: #{tpu_custom_call.1} parent=1 // pred_region
      %s75 = ssub.s32 16, 16
      %76 = vsyncadd [#allocation8], %s75
      %s78 = sshll.u32 [#allocation9], 4
      %s79 = int_to_ptr.vmem [resolvable:$true] %s78
      %81 = dma.hbm_to_vmem [thread:$0]  %s6, 16, %s79, [#allocation8]
    $region29: #{tpu_custom_call.1} parent=1 // pred_fallthru
      _
    // Predicated region
    $region30: #{tpu_custom_call.1} parent=1 // pred_check
      _
    $region31: #{tpu_custom_call.1} parent=1 // pred_check_branch
      %83 = sbr.rel (0) target = $region33
    $region32: #{tpu_custom_call.1} parent=1 // pred_region
      _
    $region33: #{tpu_custom_call.1} parent=1 // pred_fallthru
      _
    // Predicated region
    $region34: #{tpu_custom_call.1} parent=1 // pred_check
      _
    $region35: #{tpu_custom_call.1} parent=1 // pred_check_branch
      %85 = sbr.rel (0) target = $region37
    $region36: #{tpu_custom_call.1} parent=1 // pred_region
      _
    $region37: #{tpu_custom_call.1} parent=1 // pred_fallthru
      _
    // Predicated region
    $region38: #{tpu_custom_call.1} parent=1 // pred_check
      _
    $region39: #{tpu_custom_call.1} parent=1 // pred_check_branch
      %87 = sbr.rel (0) target = $region41
    $region40: #{tpu_custom_call.1} parent=1 // pred_region
      _
    $region41: #{tpu_custom_call.1} parent=1 // pred_fallthru
      _
    // Predicated region
    $region42: #{tpu_custom_call.1} parent=1 // pred_check
      _
    $region43: #{tpu_custom_call.1} parent=1 // pred_check_branch
      %89 = sbr.rel (0) target = $region45
    $region44: #{tpu_custom_call.1} parent=1 // pred_region
      _
    $region45: #{tpu_custom_call.1} parent=1 // pred_fallthru
      _
    // Predicated region
    $region46: #{tpu_custom_call.1} parent=1 // pred_check
      _
    $region47: #{tpu_custom_call.1} parent=1 // pred_check_branch
      %91 = sbr.rel (0) target = $region49
    $region48: #{tpu_custom_call.1} parent=1 // pred_region
      _
    $region49: #{tpu_custom_call.1} parent=1 // pred_fallthru
      _
    // Predicated region
    $region50: #{tpu_custom_call.1} parent=1 // pred_check
      _
    $region51: #{tpu_custom_call.1} parent=1 // pred_check_branch
      %93 = sbr.rel (0) target = $region53
    $region52: #{tpu_custom_call.1} parent=1 // pred_region
      %94 = dma.done [#allocation3], 256
    $region53: #{tpu_custom_call.1} parent=1 // pred_fallthru
      _
    // Predicated region
    $region54: #{tpu_custom_call.1} parent=1 // pred_check
      _
    $region55: #{tpu_custom_call.1} parent=1 // pred_check_branch
      %96 = sbr.rel (0) target = $region57
    $region56: #{tpu_custom_call.1} parent=1 // pred_region
      %97 = dma.done [#allocation5], 256
    $region57: #{tpu_custom_call.1} parent=1 // pred_fallthru
      _
    // Predicated region
    $region58: #{tpu_custom_call.1} parent=1 // pred_check
      _
    $region59: #{tpu_custom_call.1} parent=1 // pred_check_branch
      %99 = sbr.rel (0) target = $region61
    $region60: #{tpu_custom_call.1} parent=1 // pred_region
      %100 = dma.done [#allocation5], 256
    $region61: #{tpu_custom_call.1} parent=1 // pred_fallthru
      _
    // Predicated region
    $region62: #{tpu_custom_call.1} parent=1 // pred_check
      _
    $region63: #{tpu_custom_call.1} parent=1 // pred_check_branch
      %102 = sbr.rel (0) target = $region65
    $region64: #{tpu_custom_call.1} parent=1 // pred_region
      %103 = dma.done [#allocation8], 256
    $region65: #{tpu_custom_call.1} parent=1 // pred_fallthru
      _
    // Predicated region
    $region66: #{tpu_custom_call.1} parent=1 // pred_check
      _
    $region67: #{tpu_custom_call.1} parent=1 // pred_check_branch
      %105 = sbr.rel (0) target = $region69
    $region68: #{tpu_custom_call.1} parent=1 // pred_region
      %106 = dma.done [#allocation8], 16
    $region69: #{tpu_custom_call.1} parent=1 // pred_fallthru
      _
    %v107 = vld [vmem:[#allocation4] sm:$0xff]
    %v108 = vld [vmem:[#allocation4 + $0x8] sm:$0xff]
    %v109 = vsub.f32 %v107, 1.0
    %v110 = vsub.f32 %v108, 1.0
    %v111 = vmul.f32 %v109, 1e+30
    %v112 = vmul.f32 %v110, 1e+30
    %v113 = vld [vmem:[#allocation2] sm:$0xff]
    %v114 = vld [vmem:[#allocation2 + $0x8] sm:$0xff]
    %v115 = vld [vmem:[#allocation6] sm:$0xff]
    %v116 = vld [vmem:[#allocation6 + $0x8] sm:$0xff]
    %v117 = vld [vmem:[%s3] sm:$0x1]
    %vm118 = vcmask 130048
    %v120 = vsel %vm118, %v113, 0
    %v123 = vsel %vm118, %v114, 0
    %125 = vmatprep.subr.mxu0 0.0
    %126 = vmatpush1.msra.mxu0 %v115
    %127 = vmatprep.subr.mxu0 0.0
    %128 = vmatpush1.msra.mxu0 %v116
    %129 = vmatprep.subr.mxu0 0.0
    %130 = vmatpush1.msra.mxu0 0.0
    %131 = vmatprep.subr.mxu0 0.0
    %132 = vmatpush1.msra.mxu0 0.0
    %133 = vmatprep.subr.mxu0 0.0
    %134 = vmatpush1.msra.mxu0 0.0
    %135 = vmatprep.subr.mxu0 0.0
    %136 = vmatpush1.msra.mxu0 0.0
    %137 = vmatprep.subr.mxu0 0.0
    %138 = vmatpush1.msra.mxu0 0.0
    %139 = vmatprep.subr.mxu0 0.0
    %140 = vmatpush1.msra.mxu0 0.0
    %141 = vmatprep.subr.mxu0 0.0
    %142 = vmatpush1.msra.mxu0 0.0
    %143 = vmatprep.subr.mxu0 0.0
    %144 = vmatpush1.msra.mxu0 0.0
    %145 = vmatprep.subr.mxu0 0.0
    %146 = vmatpush1.msra.mxu0 0.0
    %147 = vmatprep.subr.mxu0 0.0
    %148 = vmatpush1.msra.mxu0 0.0
    %149 = vmatprep.subr.mxu0 0.0
    %150 = vmatpush1.msra.mxu0 0.0
    %151 = vmatprep.subr.mxu0 0.0
    %152 = vmatpush1.msra.mxu0 0.0
    %153 = vmatprep.subr.mxu0 0.0
    %154 = vmatpush1.msra.mxu0 0.0
    %155 = vmatprep.subr.mxu0 0.0
    %156 = vmatpush1.msra.mxu0 0.0
    %157 = vmatprep.subr.mxu0 0.0
    %158 = vmatpush1.msra.mxu0 0.0
    %159 = vmatprep.subr.mxu0 0.0
    %160 = vmatpush1.msra.mxu0 0.0
    %161 = vmatprep.subr.mxu0 0.0
    %162 = vmatpush1.msra.mxu0 0.0
    %163 = vmatprep.subr.mxu0 0.0
    %164 = vmatpush1.msra.mxu0 0.0
    %165 = vmatprep.subr.mxu0 0.0
    %166 = vmatpush1.msra.mxu0 0.0
    %167 = vmatprep.subr.mxu0 0.0
    %168 = vmatpush1.msra.mxu0 0.0
    %169 = vmatprep.subr.mxu0 0.0
    %170 = vmatpush1.msra.mxu0 0.0
    %171 = vmatprep.subr.mxu0 0.0
    %172 = vmatpush1.msra.mxu0 0.0
    %173 = vmatprep.subr.mxu0 0.0
    %174 = vmatpush1.msra.mxu0 0.0
    %175 = vmatprep.subr.mxu0 0.0
    %176 = vmatpush1.msra.mxu0 0.0
    %177 = vmatprep.subr.mxu0 0.0
    %178 = vmatpush1.msra.mxu0 0.0
    %179 = vmatprep.subr.mxu0 0.0
    %180 = vmatpush1.msra.mxu0 0.0
    %181 = vmatprep.subr.mxu0 0.0
    %182 = vmatpush1.msra.mxu0 0.0
    %183 = vmatprep.subr.mxu0 0.0
    %184 = vmatpush1.msra.mxu0 0.0
    %185 = vmatprep.subr.mxu0 0.0
    %186 = vmatpush1.msra.mxu0 0.0
    %187 = vmatprep.subr.mxu0 0.0
    %188 = vmatpush1.msra.mxu0 0.0
    %189 = vmatprep.mubr.f32.mxu0 0.0
    %190 = vmatmul.mubr.f32.gmra.mrb[0].mxu0 %v120
    %v191 = vpop.f32.mrb[0].mxu0
    %v192 = vadd.f32 0.0, %v191
    %v193 = vpop.f32.mrb[0].mxu0
    %194 = vmatprep.mubr.f32.mxu0 0.0
    %195 = vmatmul.mubr.f32.gmra.mrb[0].mxu0 %v123
    %v196 = vpop.f32.mrb[0].mxu0
    %v197 = vadd.f32 0.0, %v196
    %v198 = vpop.f32.mrb[0].mxu0
    %199 = vdwg.mxu0
    %202 = vrot.lane.b32.xlu0 %v192, 112
    %v203 = vpop.permute.xlu0 %202
    %204 = vrot.lane.b32.xlu0 %v197, 112
    %v205 = vpop.permute.xlu0 %204
    %208 = vxpose.xlu0.b32.start [1/16] %v203, 128
    %209 = vxpose.xlu0.b32.cont [2/16] %v205, 128
    %210 = vxpose.xlu0.b32.cont [3/16] 0.0, 128
    %211 = vxpose.xlu0.b32.cont [4/16] 0.0, 128
    %212 = vxpose.xlu0.b32.cont [5/16] 0.0, 128
    %213 = vxpose.xlu0.b32.cont [6/16] 0.0, 128
    %214 = vxpose.xlu0.b32.cont [7/16] 0.0, 128
    %215 = vxpose.xlu0.b32.cont [8/16] 0.0, 128
    %216 = vxpose.xlu0.b32.cont [9/16] 0.0, 128
    %217 = vxpose.xlu0.b32.cont [10/16] 0.0, 128
    %218 = vxpose.xlu0.b32.cont [11/16] 0.0, 128
    %219 = vxpose.xlu0.b32.cont [12/16] 0.0, 128
    %220 = vxpose.xlu0.b32.cont [13/16] 0.0, 128
    %221 = vxpose.xlu0.b32.cont [14/16] 0.0, 128
    %222 = vxpose.xlu0.b32.cont [15/16] 0.0, 128
    %223 = vxpose.xlu0.b32.end [16/16] 0.0, 128
    %v224 = vpop.trf.xlu0
    %v225 = vpop.trf.xlu0
    %v226 = vpop.trf.xlu0
    %v227 = vpop.trf.xlu0
    %v228 = vpop.trf.xlu0
    %v229 = vpop.trf.xlu0
    %v230 = vpop.trf.xlu0
    %v231 = vpop.trf.xlu0
    %v232 = vpop.trf.xlu0
    %v233 = vpop.trf.xlu0
    %v234 = vpop.trf.xlu0
    %v235 = vpop.trf.xlu0
    %v236 = vpop.trf.xlu0
    %v237 = vpop.trf.xlu0
    %v238 = vpop.trf.xlu0
    %v239 = vpop.trf.xlu0
    %v240 = vlaneseq
    %v241 = vshrl.u32 %v240, 7
    %v242 = vsub.s32 0, %v241
    %v243 = vrot.slane %v224, %v242
    %245 = vbcast.lane.b32.xlu0 %v243, 256
    %v246 = vpop.permute.xlu0 %245
    %s248 = sor.u32 256, 8
    %249 = vbcast.lane.b32.xlu0 %v243, %s248
    %v250 = vpop.permute.xlu0 %249
    %v251 = vlaneseq
    %v252 = vshrl.u32 %v251, 7
    %v253 = vsub.s32 1, %v252
    %v254 = vrot.slane %v224, %v253
    %256 = vbcast.lane.b32.xlu0 %v254, 256
    %v257 = vpop.permute.xlu0 %256
    %s259 = sor.u32 256, 8
    %260 = vbcast.lane.b32.xlu0 %v254, %s259
    %v261 = vpop.permute.xlu0 %260
    %262 = vrot.lane.b32.xlu0 %v192, 110
    %v263 = vpop.permute.xlu0 %262
    %264 = vrot.lane.b32.xlu0 %v197, 110
    %v265 = vpop.permute.xlu0 %264
    %268 = vxpose.xlu0.b32.start [1/16] %v263, 128
    %269 = vxpose.xlu0.b32.cont [2/16] %v265, 128
    %270 = vxpose.xlu0.b32.cont [3/16] 0.0, 128
    %271 = vxpose.xlu0.b32.cont [4/16] 0.0, 128
    %272 = vxpose.xlu0.b32.cont [5/16] 0.0, 128
    %273 = vxpose.xlu0.b32.cont [6/16] 0.0, 128
    %274 = vxpose.xlu0.b32.cont [7/16] 0.0, 128
    %275 = vxpose.xlu0.b32.cont [8/16] 0.0, 128
    %276 = vxpose.xlu0.b32.cont [9/16] 0.0, 128
    %277 = vxpose.xlu0.b32.cont [10/16] 0.0, 128
    %278 = vxpose.xlu0.b32.cont [11/16] 0.0, 128
    %279 = vxpose.xlu0.b32.cont [12/16] 0.0, 128
    %280 = vxpose.xlu0.b32.cont [13/16] 0.0, 128
    %281 = vxpose.xlu0.b32.cont [14/16] 0.0, 128
    %282 = vxpose.xlu0.b32.cont [15/16] 0.0, 128
    %283 = vxpose.xlu0.b32.end [16/16] 0.0, 128
    %v284 = vpop.trf.xlu0
    %v285 = vpop.trf.xlu0
    %v286 = vpop.trf.xlu0
    %v287 = vpop.trf.xlu0
    %v288 = vpop.trf.xlu0
    %v289 = vpop.trf.xlu0
    %v290 = vpop.trf.xlu0
    %v291 = vpop.trf.xlu0
    %v292 = vpop.trf.xlu0
    %v293 = vpop.trf.xlu0
    %v294 = vpop.trf.xlu0
    %v295 = vpop.trf.xlu0
    %v296 = vpop.trf.xlu0
    %v297 = vpop.trf.xlu0
    %v298 = vpop.trf.xlu0
    %v299 = vpop.trf.xlu0
    %v302 = vunpack.c.l.s4 1966171168
    %v303 = vunpack.c.0.s8 %v302
    %v304 = vlaneseq
    %v305 = vshrl.u32 %v304, 7
    %v306 = vsub.s32 %v303, %v305
    %v307 = vrot.slane %v284, %v306
    %v308 = vcombine.high %v307, %v307
    %v310 = vunpack.c.l.s4 1966171168
    %v311 = vunpack.c.0.s8 %v310
    %v312 = vlaneseq
    %v313 = vshrl.u32 %v312, 7
    %v314 = vsub.s32 %v311, %v313
    %v315 = vrot.slane %v307, %v314
    %v317 = vunpack.c.l.s4 1966171168
    %v318 = vunpack.c.0.s8 %v317
    %v319 = vlaneseq
    %v320 = vshrl.u32 %v319, 7
    %v321 = vsub.s32 %v318, %v320
    %v322 = vrot.slane %v308, %v321
    %v323 = vlaneseq
    %v324 = vshrl.u32 %v323, 7
    %v325 = vsub.s32 0, %v324
    %v326 = vrot.slane %v315, %v325
    %v327 = vlaneseq
    %v328 = vshrl.u32 %v327, 7
    %v329 = vsub.s32 0, %v328
    %v330 = vrot.slane %v322, %v329
    %v333 = vadd.f32 %v246, %v326
    %v334 = vadd.f32 %v250, %v326
    %v335 = vadd.f32 %v257, %v330
    %v336 = vadd.f32 %v261, %v330
    %v337 = vmul.f32 %v333, 0.2
    %v338 = vmul.f32 %v334, 0.2
    %v339 = vmul.f32 %v335, 0.2
    %v340 = vmul.f32 %v336, 0.2
    %v341 = vmax.f32 %v333, %v337
    %v342 = vmax.f32 %v334, %v338
    %v343 = vmax.f32 %v335, %v339
    %v344 = vmax.f32 %v336, %v340
    %v345 = vadd.f32 %v341, %v111
    %v346 = vadd.f32 %v342, %v112
    %v347 = vadd.f32 %v343, %v111
    %v348 = vadd.f32 %v344, %v112
    %v349 = vsel %vm118, %v345, -inf
    %350 = vmax.xlane.f32.xlu0 %v349
    %v351 = vpop.xlane.xlu0 %350
    %v352 = vsel %vm118, %v346, -inf
    %353 = vmax.xlane.f32.xlu0 %v352
    %v354 = vpop.xlane.xlu0 %353
    %v355 = vsel %vm118, %v347, -inf
    %356 = vmax.xlane.f32.xlu0 %v355
    %v357 = vpop.xlane.xlu0 %356
    %v358 = vsel %vm118, %v348, -inf
    %359 = vmax.xlane.f32.xlu0 %v358
    %v360 = vpop.xlane.xlu0 %359
    %v361 = vsub.f32 %v345, %v351
    %v362 = vsub.f32 %v346, %v354
    %v363 = vsub.f32 %v347, %v357
    %v364 = vsub.f32 %v348, %v360
    %v365 = vmul.f32 %v361, 1.442695
    %v366 = vpow.pop %v365
    %v367 = vmul.f32 %v362, 1.442695
    %v368 = vpow.pop %v367
    %v369 = vmul.f32 %v363, 1.442695
    %v370 = vpow.pop %v369
    %v371 = vmul.f32 %v364, 1.442695
    %v372 = vpow.pop %v371
    %v373 = vsel %vm118, %v366, 0.0
    %374 = vadd.xlane.f32.xlu0 %v373
    %v375 = vpop.xlane.xlu0 %374
    %v376 = vsel %vm118, %v368, 0.0
    %377 = vadd.xlane.f32.xlu0 %v376
    %v378 = vpop.xlane.xlu0 %377
    %v379 = vsel %vm118, %v370, 0.0
    %380 = vadd.xlane.f32.xlu0 %v379
    %v381 = vpop.xlane.xlu0 %380
    %v382 = vsel %vm118, %v372, 0.0
    %383 = vadd.xlane.f32.xlu0 %v382
    %v384 = vpop.xlane.xlu0 %383
    %v385 = vrcp.pop %v375
    %v386 = vrcp.pop %v378
    %v387 = vrcp.pop %v381
    %v388 = vrcp.pop %v384
    %v389 = vmul.f32 %v366, %v385
    %v390 = vmul.f32 %v368, %v386
    %v391 = vmul.f32 %v370, %v387
    %v392 = vmul.f32 %v372, %v388
    %v394 = vsel %vm118, %v389, 0
    %v397 = vsel %vm118, %v390, 0
    %399 = vmatprep.subr.mxu0 0.0
    %400 = vmatpush1.msra.mxu0 %v192
    %401 = vmatprep.subr.mxu0 0.0
    %402 = vmatpush1.msra.mxu0 %v197
    %403 = vmatprep.subr.mxu0 0.0
    %404 = vmatpush1.msra.mxu0 0.0
    %405 = vmatprep.subr.mxu0 0.0
    %406 = vmatpush1.msra.mxu0 0.0
    %407 = vmatprep.subr.mxu0 0.0
    %408 = vmatpush1.msra.mxu0 0.0
    %409 = vmatprep.subr.mxu0 0.0
    %410 = vmatpush1.msra.mxu0 0.0
    %411 = vmatprep.subr.mxu0 0.0
    %412 = vmatpush1.msra.mxu0 0.0
    %413 = vmatprep.subr.mxu0 0.0
    %414 = vmatpush1.msra.mxu0 0.0
    %415 = vmatprep.subr.mxu0 0.0
    %416 = vmatpush1.msra.mxu0 0.0
    %417 = vmatprep.subr.mxu0 0.0
    %418 = vmatpush1.msra.mxu0 0.0
    %419 = vmatprep.subr.mxu0 0.0
    %420 = vmatpush1.msra.mxu0 0.0
    %421 = vmatprep.subr.mxu0 0.0
    %422 = vmatpush1.msra.mxu0 0.0
    %423 = vmatprep.subr.mxu0 0.0
    %424 = vmatpush1.msra.mxu0 0.0
    %425 = vmatprep.subr.mxu0 0.0
    %426 = vmatpush1.msra.mxu0 0.0
    %427 = vmatprep.subr.mxu0 0.0
    %428 = vmatpush1.msra.mxu0 0.0
    %429 = vmatprep.subr.mxu0 0.0
    %430 = vmatpush1.msra.mxu0 0.0
    %431 = vmatprep.subr.mxu0 0.0
    %432 = vmatpush1.msra.mxu0 0.0
    %433 = vmatprep.subr.mxu0 0.0
    %434 = vmatpush1.msra.mxu0 0.0
    %435 = vmatprep.subr.mxu0 0.0
    %436 = vmatpush1.msra.mxu0 0.0
    %437 = vmatprep.subr.mxu0 0.0
    %438 = vmatpush1.msra.mxu0 0.0
    %439 = vmatprep.subr.mxu0 0.0
    %440 = vmatpush1.msra.mxu0 0.0
    %441 = vmatprep.subr.mxu0 0.0
    %442 = vmatpush1.msra.mxu0 0.0
    %443 = vmatprep.subr.mxu0 0.0
    %444 = vmatpush1.msra.mxu0 0.0
    %445 = vmatprep.subr.mxu0 0.0
    %446 = vmatpush1.msra.mxu0 0.0
    %447 = vmatprep.subr.mxu0 0.0
    %448 = vmatpush1.msra.mxu0 0.0
    %449 = vmatprep.subr.mxu0 0.0
    %450 = vmatpush1.msra.mxu0 0.0
    %451 = vmatprep.subr.mxu0 0.0
    %452 = vmatpush1.msra.mxu0 0.0
    %453 = vmatprep.subr.mxu0 0.0
    %454 = vmatpush1.msra.mxu0 0.0
    %455 = vmatprep.subr.mxu0 0.0
    %456 = vmatpush1.msra.mxu0 0.0
    %457 = vmatprep.subr.mxu0 0.0
    %458 = vmatpush1.msra.mxu0 0.0
    %459 = vmatprep.subr.mxu0 0.0
    %460 = vmatpush1.msra.mxu0 0.0
    %461 = vmatprep.subr.mxu0 0.0
    %462 = vmatpush1.msra.mxu0 0.0
    %463 = vmatprep.mubr.f32.mxu0 0.0
    %464 = vmatmul.mubr.f32.gmra.mrb[0].mxu0 %v394
    %v465 = vpop.f32.mrb[0].mxu0
    %v466 = vadd.f32 0.0, %v465
    %v467 = vpop.f32.mrb[0].mxu0
    %468 = vmatprep.mubr.f32.mxu0 0.0
    %469 = vmatmul.mubr.f32.gmra.mrb[0].mxu0 %v397
    %v470 = vpop.f32.mrb[0].mxu0
    %v471 = vadd.f32 0.0, %v470
    %v472 = vpop.f32.mrb[0].mxu0
    %473 = vdwg.mxu0
    %474 = vrot.lane.b32.xlu0 %v192, 120
    %v475 = vpop.permute.xlu0 %474
    %476 = vrot.lane.b32.xlu0 %v197, 120
    %v477 = vpop.permute.xlu0 %476
    %v481 = vsel %vm118, %v391, 0
    %v484 = vsel %vm118, %v392, 0
    %486 = vmatprep.subr.mxu0 0.0
    %487 = vmatpush1.msra.mxu0 %v475
    %488 = vmatprep.subr.mxu0 0.0
    %489 = vmatpush1.msra.mxu0 %v477
    %490 = vmatprep.subr.mxu0 0.0
    %491 = vmatpush1.msra.mxu0 0.0
    %492 = vmatprep.subr.mxu0 0.0
    %493 = vmatpush1.msra.mxu0 0.0
    %494 = vmatprep.subr.mxu0 0.0
    %495 = vmatpush1.msra.mxu0 0.0
    %496 = vmatprep.subr.mxu0 0.0
    %497 = vmatpush1.msra.mxu0 0.0
    %498 = vmatprep.subr.mxu0 0.0
    %499 = vmatpush1.msra.mxu0 0.0
    %500 = vmatprep.subr.mxu0 0.0
    %501 = vmatpush1.msra.mxu0 0.0
    %502 = vmatprep.subr.mxu0 0.0
    %503 = vmatpush1.msra.mxu0 0.0
    %504 = vmatprep.subr.mxu0 0.0
    %505 = vmatpush1.msra.mxu0 0.0
    %506 = vmatprep.subr.mxu0 0.0
    %507 = vmatpush1.msra.mxu0 0.0
    %508 = vmatprep.subr.mxu0 0.0
    %509 = vmatpush1.msra.mxu0 0.0
    %510 = vmatprep.subr.mxu0 0.0
    %511 = vmatpush1.msra.mxu0 0.0
    %512 = vmatprep.subr.mxu0 0.0
    %513 = vmatpush1.msra.mxu0 0.0
    %514 = vmatprep.subr.mxu0 0.0
    %515 = vmatpush1.msra.mxu0 0.0
    %516 = vmatprep.subr.mxu0 0.0
    %517 = vmatpush1.msra.mxu0 0.0
    %518 = vmatprep.subr.mxu0 0.0
    %519 = vmatpush1.msra.mxu0 0.0
    %520 = vmatprep.subr.mxu0 0.0
    %521 = vmatpush1.msra.mxu0 0.0
    %522 = vmatprep.subr.mxu0 0.0
    %523 = vmatpush1.msra.mxu0 0.0
    %524 = vmatprep.subr.mxu0 0.0
    %525 = vmatpush1.msra.mxu0 0.0
    %526 = vmatprep.subr.mxu0 0.0
    %527 = vmatpush1.msra.mxu0 0.0
    %528 = vmatprep.subr.mxu0 0.0
    %529 = vmatpush1.msra.mxu0 0.0
    %530 = vmatprep.subr.mxu0 0.0
    %531 = vmatpush1.msra.mxu0 0.0
    %532 = vmatprep.subr.mxu0 0.0
    %533 = vmatpush1.msra.mxu0 0.0
    %534 = vmatprep.subr.mxu0 0.0
    %535 = vmatpush1.msra.mxu0 0.0
    %536 = vmatprep.subr.mxu0 0.0
    %537 = vmatpush1.msra.mxu0 0.0
    %538 = vmatprep.subr.mxu0 0.0
    %539 = vmatpush1.msra.mxu0 0.0
    %540 = vmatprep.subr.mxu0 0.0
    %541 = vmatpush1.msra.mxu0 0.0
    %542 = vmatprep.subr.mxu0 0.0
    %543 = vmatpush1.msra.mxu0 0.0
    %544 = vmatprep.subr.mxu0 0.0
    %545 = vmatpush1.msra.mxu0 0.0
    %546 = vmatprep.subr.mxu0 0.0
    %547 = vmatpush1.msra.mxu0 0.0
    %548 = vmatprep.subr.mxu0 0.0
    %549 = vmatpush1.msra.mxu0 0.0
    %550 = vmatprep.mubr.f32.mxu0 0.0
    %551 = vmatmul.mubr.f32.gmra.mrb[0].mxu0 %v481
    %v552 = vpop.f32.mrb[0].mxu0
    %v553 = vadd.f32 0.0, %v552
    %v554 = vpop.f32.mrb[0].mxu0
    %555 = vmatprep.mubr.f32.mxu0 0.0
    %556 = vmatmul.mubr.f32.gmra.mrb[0].mxu0 %v484
    %v557 = vpop.f32.mrb[0].mxu0
    %v558 = vadd.f32 0.0, %v557
    %v559 = vpop.f32.mrb[0].mxu0
    %560 = vdwg.mxu0
    %563 = vrot.lane.b32.xlu0 %v553, 8
    %v564 = vpop.permute.xlu0 %563
    %565 = vrot.lane.b32.xlu0 %v558, 8
    %v566 = vpop.permute.xlu0 %565
    %vm569 = vcmask 64512
    %v570 = vsel %vm569, %v466, %v564
    %v571 = vsel %vm569, %v471, %v566
    %v573 = vlaneseq
    %v574 = vshrl.u32 %v573, 7
    %v575 = vsub.s32 0, %v574
    %v576 = vrot.slane %v117, %v575
    %v578 = vadd.f32 %v570, %v576
    %v579 = vadd.f32 %v571, %v576
    %v580 = vmax.f32 %v578, 0.0
    %v581 = vmax.f32 %v579, 0.0
    %v582 = vld [vmem:[#allocation7] sm:$0xff]
    %v583 = vld [vmem:[#allocation7 + $0x8] sm:$0xff]
    %v584 = vld [vmem:[%s5] sm:$0x1]
    %v586 = vsel %vm118, %v580, 0
    %v589 = vsel %vm118, %v581, 0
    %591 = vmatprep.subr.mxu0 0.0
    %592 = vmatpush1.msra.mxu0 %v582
    %593 = vmatprep.subr.mxu0 0.0
    %594 = vmatpush1.msra.mxu0 %v583
    %595 = vmatprep.subr.mxu0 0.0
    %596 = vmatpush1.msra.mxu0 0.0
    %597 = vmatprep.subr.mxu0 0.0
    %598 = vmatpush1.msra.mxu0 0.0
    %599 = vmatprep.subr.mxu0 0.0
    %600 = vmatpush1.msra.mxu0 0.0
    %601 = vmatprep.subr.mxu0 0.0
    %602 = vmatpush1.msra.mxu0 0.0
    %603 = vmatprep.subr.mxu0 0.0
    %604 = vmatpush1.msra.mxu0 0.0
    %605 = vmatprep.subr.mxu0 0.0
    %606 = vmatpush1.msra.mxu0 0.0
    %607 = vmatprep.subr.mxu0 0.0
    %608 = vmatpush1.msra.mxu0 0.0
    %609 = vmatprep.subr.mxu0 0.0
    %610 = vmatpush1.msra.mxu0 0.0
    %611 = vmatprep.subr.mxu0 0.0
    %612 = vmatpush1.msra.mxu0 0.0
    %613 = vmatprep.subr.mxu0 0.0
    %614 = vmatpush1.msra.mxu0 0.0
    %615 = vmatprep.subr.mxu0 0.0
    %616 = vmatpush1.msra.mxu0 0.0
    %617 = vmatprep.subr.mxu0 0.0
    %618 = vmatpush1.msra.mxu0 0.0
    %619 = vmatprep.subr.mxu0 0.0
    %620 = vmatpush1.msra.mxu0 0.0
    %621 = vmatprep.subr.mxu0 0.0
    %622 = vmatpush1.msra.mxu0 0.0
    %623 = vmatprep.subr.mxu0 0.0
    %624 = vmatpush1.msra.mxu0 0.0
    %625 = vmatprep.subr.mxu0 0.0
    %626 = vmatpush1.msra.mxu0 0.0
    %627 = vmatprep.subr.mxu0 0.0
    %628 = vmatpush1.msra.mxu0 0.0
    %629 = vmatprep.subr.mxu0 0.0
    %630 = vmatpush1.msra.mxu0 0.0
    %631 = vmatprep.subr.mxu0 0.0
    %632 = vmatpush1.msra.mxu0 0.0
    %633 = vmatprep.subr.mxu0 0.0
    %634 = vmatpush1.msra.mxu0 0.0
    %635 = vmatprep.subr.mxu0 0.0
    %636 = vmatpush1.msra.mxu0 0.0
    %637 = vmatprep.subr.mxu0 0.0
    %638 = vmatpush1.msra.mxu0 0.0
    %639 = vmatprep.subr.mxu0 0.0
    %640 = vmatpush1.msra.mxu0 0.0
    %641 = vmatprep.subr.mxu0 0.0
    %642 = vmatpush1.msra.mxu0 0.0
    %643 = vmatprep.subr.mxu0 0.0
    %644 = vmatpush1.msra.mxu0 0.0
    %645 = vmatprep.subr.mxu0 0.0
    %646 = vmatpush1.msra.mxu0 0.0
    %647 = vmatprep.subr.mxu0 0.0
    %648 = vmatpush1.msra.mxu0 0.0
    %649 = vmatprep.subr.mxu0 0.0
    %650 = vmatpush1.msra.mxu0 0.0
    %651 = vmatprep.subr.mxu0 0.0
    %652 = vmatpush1.msra.mxu0 0.0
    %653 = vmatprep.subr.mxu0 0.0
    %654 = vmatpush1.msra.mxu0 0.0
    %655 = vmatprep.mubr.f32.mxu0 0.0
    %656 = vmatmul.mubr.f32.gmra.mrb[0].mxu0 %v586
    %v657 = vpop.f32.mrb[0].mxu0
    %v658 = vadd.f32 0.0, %v657
    %v659 = vpop.f32.mrb[0].mxu0
    %660 = vmatprep.mubr.f32.mxu0 0.0
    %661 = vmatmul.mubr.f32.gmra.mrb[0].mxu0 %v589
    %v662 = vpop.f32.mrb[0].mxu0
    %v663 = vadd.f32 0.0, %v662
    %v664 = vpop.f32.mrb[0].mxu0
    %665 = vdwg.mxu0
    %668 = vrot.lane.b32.xlu0 %v658, 112
    %v669 = vpop.permute.xlu0 %668
    %670 = vrot.lane.b32.xlu0 %v663, 112
    %v671 = vpop.permute.xlu0 %670
    %674 = vxpose.xlu0.b32.start [1/16] %v669, 128
    %675 = vxpose.xlu0.b32.cont [2/16] %v671, 128
    %676 = vxpose.xlu0.b32.cont [3/16] 0.0, 128
    %677 = vxpose.xlu0.b32.cont [4/16] 0.0, 128
    %678 = vxpose.xlu0.b32.cont [5/16] 0.0, 128
    %679 = vxpose.xlu0.b32.cont [6/16] 0.0, 128
    %680 = vxpose.xlu0.b32.cont [7/16] 0.0, 128
    %681 = vxpose.xlu0.b32.cont [8/16] 0.0, 128
    %682 = vxpose.xlu0.b32.cont [9/16] 0.0, 128
    %683 = vxpose.xlu0.b32.cont [10/16] 0.0, 128
    %684 = vxpose.xlu0.b32.cont [11/16] 0.0, 128
    %685 = vxpose.xlu0.b32.cont [12/16] 0.0, 128
    %686 = vxpose.xlu0.b32.cont [13/16] 0.0, 128
    %687 = vxpose.xlu0.b32.cont [14/16] 0.0, 128
    %688 = vxpose.xlu0.b32.cont [15/16] 0.0, 128
    %689 = vxpose.xlu0.b32.end [16/16] 0.0, 128
    %v690 = vpop.trf.xlu0
    %v691 = vpop.trf.xlu0
    %v692 = vpop.trf.xlu0
    %v693 = vpop.trf.xlu0
    %v694 = vpop.trf.xlu0
    %v695 = vpop.trf.xlu0
    %v696 = vpop.trf.xlu0
    %v697 = vpop.trf.xlu0
    %v698 = vpop.trf.xlu0
    %v699 = vpop.trf.xlu0
    %v700 = vpop.trf.xlu0
    %v701 = vpop.trf.xlu0
    %v702 = vpop.trf.xlu0
    %v703 = vpop.trf.xlu0
    %v704 = vpop.trf.xlu0
    %v705 = vpop.trf.xlu0
    %v706 = vlaneseq
    %v707 = vshrl.u32 %v706, 7
    %v708 = vsub.s32 0, %v707
    %v709 = vrot.slane %v690, %v708
    %711 = vbcast.lane.b32.xlu0 %v709, 256
    %v712 = vpop.permute.xlu0 %711
    %s714 = sor.u32 256, 8
    %715 = vbcast.lane.b32.xlu0 %v709, %s714
    %v716 = vpop.permute.xlu0 %715
    %v717 = vlaneseq
    %v718 = vshrl.u32 %v717, 7
    %v719 = vsub.s32 1, %v718
    %v720 = vrot.slane %v690, %v719
    %722 = vbcast.lane.b32.xlu0 %v720, 256
    %v723 = vpop.permute.xlu0 %722
    %s725 = sor.u32 256, 8
    %726 = vbcast.lane.b32.xlu0 %v720, %s725
    %v727 = vpop.permute.xlu0 %726
    %728 = vrot.lane.b32.xlu0 %v658, 110
    %v729 = vpop.permute.xlu0 %728
    %730 = vrot.lane.b32.xlu0 %v663, 110
    %v731 = vpop.permute.xlu0 %730
    %734 = vxpose.xlu0.b32.start [1/16] %v729, 128
    %735 = vxpose.xlu0.b32.cont [2/16] %v731, 128
    %736 = vxpose.xlu0.b32.cont [3/16] 0.0, 128
    %737 = vxpose.xlu0.b32.cont [4/16] 0.0, 128
    %738 = vxpose.xlu0.b32.cont [5/16] 0.0, 128
    %739 = vxpose.xlu0.b32.cont [6/16] 0.0, 128
    %740 = vxpose.xlu0.b32.cont [7/16] 0.0, 128
    %741 = vxpose.xlu0.b32.cont [8/16] 0.0, 128
    %742 = vxpose.xlu0.b32.cont [9/16] 0.0, 128
    %743 = vxpose.xlu0.b32.cont [10/16] 0.0, 128
    %744 = vxpose.xlu0.b32.cont [11/16] 0.0, 128
    %745 = vxpose.xlu0.b32.cont [12/16] 0.0, 128
    %746 = vxpose.xlu0.b32.cont [13/16] 0.0, 128
    %747 = vxpose.xlu0.b32.cont [14/16] 0.0, 128
    %748 = vxpose.xlu0.b32.cont [15/16] 0.0, 128
    %749 = vxpose.xlu0.b32.end [16/16] 0.0, 128
    %v750 = vpop.trf.xlu0
    %v751 = vpop.trf.xlu0
    %v752 = vpop.trf.xlu0
    %v753 = vpop.trf.xlu0
    %v754 = vpop.trf.xlu0
    %v755 = vpop.trf.xlu0
    %v756 = vpop.trf.xlu0
    %v757 = vpop.trf.xlu0
    %v758 = vpop.trf.xlu0
    %v759 = vpop.trf.xlu0
    %v760 = vpop.trf.xlu0
    %v761 = vpop.trf.xlu0
    %v762 = vpop.trf.xlu0
    %v763 = vpop.trf.xlu0
    %v764 = vpop.trf.xlu0
    %v765 = vpop.trf.xlu0
    %v768 = vunpack.c.l.s4 1966171168
    %v769 = vunpack.c.0.s8 %v768
    %v770 = vlaneseq
    %v771 = vshrl.u32 %v770, 7
    %v772 = vsub.s32 %v769, %v771
    %v773 = vrot.slane %v750, %v772
    %v774 = vcombine.high %v773, %v773
    %v776 = vunpack.c.l.s4 1966171168
    %v777 = vunpack.c.0.s8 %v776
    %v778 = vlaneseq
    %v779 = vshrl.u32 %v778, 7
    %v780 = vsub.s32 %v777, %v779
    %v781 = vrot.slane %v773, %v780
    %v783 = vunpack.c.l.s4 1966171168
    %v784 = vunpack.c.0.s8 %v783
    %v785 = vlaneseq
    %v786 = vshrl.u32 %v785, 7
    %v787 = vsub.s32 %v784, %v786
    %v788 = vrot.slane %v774, %v787
    %v789 = vlaneseq
    %v790 = vshrl.u32 %v789, 7
    %v791 = vsub.s32 0, %v790
    %v792 = vrot.slane %v781, %v791
    %v793 = vlaneseq
    %v794 = vshrl.u32 %v793, 7
    %v795 = vsub.s32 0, %v794
    %v796 = vrot.slane %v788, %v795
    %v799 = vadd.f32 %v712, %v792
    %v800 = vadd.f32 %v716, %v792
    %v801 = vadd.f32 %v723, %v796
    %v802 = vadd.f32 %v727, %v796
    %v803 = vmul.f32 %v799, 0.2
    %v804 = vmul.f32 %v800, 0.2
    %v805 = vmul.f32 %v801, 0.2
    %v806 = vmul.f32 %v802, 0.2
    %v807 = vmax.f32 %v799, %v803
    %v808 = vmax.f32 %v800, %v804
    %v809 = vmax.f32 %v801, %v805
    %v810 = vmax.f32 %v802, %v806
    %v811 = vadd.f32 %v807, %v111
    %v812 = vadd.f32 %v808, %v112
    %v813 = vadd.f32 %v809, %v111
    %v814 = vadd.f32 %v810, %v112
    %v815 = vsel %vm118, %v811, -inf
    %816 = vmax.xlane.f32.xlu0 %v815
    %v817 = vpop.xlane.xlu0 %816
    %v818 = vsel %vm118, %v812, -inf
    %819 = vmax.xlane.f32.xlu0 %v818
    %v820 = vpop.xlane.xlu0 %819
    %v821 = vsel %vm118, %v813, -inf
    %822 = vmax.xlane.f32.xlu0 %v821
    %v823 = vpop.xlane.xlu0 %822
    %v824 = vsel %vm118, %v814, -inf
    %825 = vmax.xlane.f32.xlu0 %v824
    %v826 = vpop.xlane.xlu0 %825
    %v827 = vsub.f32 %v811, %v817
    %v828 = vsub.f32 %v812, %v820
    %v829 = vsub.f32 %v813, %v823
    %v830 = vsub.f32 %v814, %v826
    %v831 = vmul.f32 %v827, 1.442695
    %v832 = vpow.pop %v831
    %v833 = vmul.f32 %v828, 1.442695
    %v834 = vpow.pop %v833
    %v835 = vmul.f32 %v829, 1.442695
    %v836 = vpow.pop %v835
    %v837 = vmul.f32 %v830, 1.442695
    %v838 = vpow.pop %v837
    %v839 = vsel %vm118, %v832, 0.0
    %840 = vadd.xlane.f32.xlu0 %v839
    %v841 = vpop.xlane.xlu0 %840
    %v842 = vsel %vm118, %v834, 0.0
    %843 = vadd.xlane.f32.xlu0 %v842
    %v844 = vpop.xlane.xlu0 %843
    %v845 = vsel %vm118, %v836, 0.0
    %846 = vadd.xlane.f32.xlu0 %v845
    %v847 = vpop.xlane.xlu0 %846
    %v848 = vsel %vm118, %v838, 0.0
    %849 = vadd.xlane.f32.xlu0 %v848
    %v850 = vpop.xlane.xlu0 %849
    %v851 = vrcp.pop %v841
    %v852 = vrcp.pop %v844
    %v853 = vrcp.pop %v847
    %v854 = vrcp.pop %v850
    %v855 = vmul.f32 %v832, %v851
    %v856 = vmul.f32 %v834, %v852
    %v857 = vmul.f32 %v836, %v853
    %v858 = vmul.f32 %v838, %v854
    %v860 = vsel %vm118, %v855, 0
    %v863 = vsel %vm118, %v856, 0
    %865 = vmatprep.subr.mxu0 0.0
    %866 = vmatpush1.msra.mxu0 %v658
    %867 = vmatprep.subr.mxu0 0.0
    %868 = vmatpush1.msra.mxu0 %v663
    %869 = vmatprep.subr.mxu0 0.0
    %870 = vmatpush1.msra.mxu0 0.0
    %871 = vmatprep.subr.mxu0 0.0
    %872 = vmatpush1.msra.mxu0 0.0
    %873 = vmatprep.subr.mxu0 0.0
    %874 = vmatpush1.msra.mxu0 0.0
    %875 = vmatprep.subr.mxu0 0.0
    %876 = vmatpush1.msra.mxu0 0.0
    %877 = vmatprep.subr.mxu0 0.0
    %878 = vmatpush1.msra.mxu0 0.0
    %879 = vmatprep.subr.mxu0 0.0
    %880 = vmatpush1.msra.mxu0 0.0
    %881 = vmatprep.subr.mxu0 0.0
    %882 = vmatpush1.msra.mxu0 0.0
    %883 = vmatprep.subr.mxu0 0.0
    %884 = vmatpush1.msra.mxu0 0.0
    %885 = vmatprep.subr.mxu0 0.0
    %886 = vmatpush1.msra.mxu0 0.0
    %887 = vmatprep.subr.mxu0 0.0
    %888 = vmatpush1.msra.mxu0 0.0
    %889 = vmatprep.subr.mxu0 0.0
    %890 = vmatpush1.msra.mxu0 0.0
    %891 = vmatprep.subr.mxu0 0.0
    %892 = vmatpush1.msra.mxu0 0.0
    %893 = vmatprep.subr.mxu0 0.0
    %894 = vmatpush1.msra.mxu0 0.0
    %895 = vmatprep.subr.mxu0 0.0
    %896 = vmatpush1.msra.mxu0 0.0
    %897 = vmatprep.subr.mxu0 0.0
    %898 = vmatpush1.msra.mxu0 0.0
    %899 = vmatprep.subr.mxu0 0.0
    %900 = vmatpush1.msra.mxu0 0.0
    %901 = vmatprep.subr.mxu0 0.0
    %902 = vmatpush1.msra.mxu0 0.0
    %903 = vmatprep.subr.mxu0 0.0
    %904 = vmatpush1.msra.mxu0 0.0
    %905 = vmatprep.subr.mxu0 0.0
    %906 = vmatpush1.msra.mxu0 0.0
    %907 = vmatprep.subr.mxu0 0.0
    %908 = vmatpush1.msra.mxu0 0.0
    %909 = vmatprep.subr.mxu0 0.0
    %910 = vmatpush1.msra.mxu0 0.0
    %911 = vmatprep.subr.mxu0 0.0
    %912 = vmatpush1.msra.mxu0 0.0
    %913 = vmatprep.subr.mxu0 0.0
    %914 = vmatpush1.msra.mxu0 0.0
    %915 = vmatprep.subr.mxu0 0.0
    %916 = vmatpush1.msra.mxu0 0.0
    %917 = vmatprep.subr.mxu0 0.0
    %918 = vmatpush1.msra.mxu0 0.0
    %919 = vmatprep.subr.mxu0 0.0
    %920 = vmatpush1.msra.mxu0 0.0
    %921 = vmatprep.subr.mxu0 0.0
    %922 = vmatpush1.msra.mxu0 0.0
    %923 = vmatprep.subr.mxu0 0.0
    %924 = vmatpush1.msra.mxu0 0.0
    %925 = vmatprep.subr.mxu0 0.0
    %926 = vmatpush1.msra.mxu0 0.0
    %927 = vmatprep.subr.mxu0 0.0
    %928 = vmatpush1.msra.mxu0 0.0
    %929 = vmatprep.mubr.f32.mxu0 0.0
    %930 = vmatmul.mubr.f32.gmra.mrb[0].mxu0 %v860
    %v931 = vpop.f32.mrb[0].mxu0
    %v932 = vadd.f32 0.0, %v931
    %v933 = vpop.f32.mrb[0].mxu0
    %934 = vmatprep.mubr.f32.mxu0 0.0
    %935 = vmatmul.mubr.f32.gmra.mrb[0].mxu0 %v863
    %v936 = vpop.f32.mrb[0].mxu0
    %v937 = vadd.f32 0.0, %v936
    %v938 = vpop.f32.mrb[0].mxu0
    %939 = vdwg.mxu0
    %940 = vrot.lane.b32.xlu0 %v658, 120
    %v941 = vpop.permute.xlu0 %940
    %942 = vrot.lane.b32.xlu0 %v663, 120
    %v943 = vpop.permute.xlu0 %942
    %v947 = vsel %vm118, %v857, 0
    %v950 = vsel %vm118, %v858, 0
    %952 = vmatprep.subr.mxu0 0.0
    %953 = vmatpush1.msra.mxu0 %v941
    %954 = vmatprep.subr.mxu0 0.0
    %955 = vmatpush1.msra.mxu0 %v943
    %956 = vmatprep.subr.mxu0 0.0
    %957 = vmatpush1.msra.mxu0 0.0
    %958 = vmatprep.subr.mxu0 0.0
    %959 = vmatpush1.msra.mxu0 0.0
    %960 = vmatprep.subr.mxu0 0.0
    %961 = vmatpush1.msra.mxu0 0.0
    %962 = vmatprep.subr.mxu0 0.0
    %963 = vmatpush1.msra.mxu0 0.0
    %964 = vmatprep.subr.mxu0 0.0
    %965 = vmatpush1.msra.mxu0 0.0
    %966 = vmatprep.subr.mxu0 0.0
    %967 = vmatpush1.msra.mxu0 0.0
    %968 = vmatprep.subr.mxu0 0.0
    %969 = vmatpush1.msra.mxu0 0.0
    %970 = vmatprep.subr.mxu0 0.0
    %971 = vmatpush1.msra.mxu0 0.0
    %972 = vmatprep.subr.mxu0 0.0
    %973 = vmatpush1.msra.mxu0 0.0
    %974 = vmatprep.subr.mxu0 0.0
    %975 = vmatpush1.msra.mxu0 0.0
    %976 = vmatprep.subr.mxu0 0.0
    %977 = vmatpush1.msra.mxu0 0.0
    %978 = vmatprep.subr.mxu0 0.0
    %979 = vmatpush1.msra.mxu0 0.0
    %980 = vmatprep.subr.mxu0 0.0
    %981 = vmatpush1.msra.mxu0 0.0
    %982 = vmatprep.subr.mxu0 0.0
    %983 = vmatpush1.msra.mxu0 0.0
    %984 = vmatprep.subr.mxu0 0.0
    %985 = vmatpush1.msra.mxu0 0.0
    %986 = vmatprep.subr.mxu0 0.0
    %987 = vmatpush1.msra.mxu0 0.0
    %988 = vmatprep.subr.mxu0 0.0
    %989 = vmatpush1.msra.mxu0 0.0
    %990 = vmatprep.subr.mxu0 0.0
    %991 = vmatpush1.msra.mxu0 0.0
    %992 = vmatprep.subr.mxu0 0.0
    %993 = vmatpush1.msra.mxu0 0.0
    %994 = vmatprep.subr.mxu0 0.0
    %995 = vmatpush1.msra.mxu0 0.0
    %996 = vmatprep.subr.mxu0 0.0
    %997 = vmatpush1.msra.mxu0 0.0
    %998 = vmatprep.subr.mxu0 0.0
    %999 = vmatpush1.msra.mxu0 0.0
    %1000 = vmatprep.subr.mxu0 0.0
    %1001 = vmatpush1.msra.mxu0 0.0
    %1002 = vmatprep.subr.mxu0 0.0
    %1003 = vmatpush1.msra.mxu0 0.0
    %1004 = vmatprep.subr.mxu0 0.0
    %1005 = vmatpush1.msra.mxu0 0.0
    %1006 = vmatprep.subr.mxu0 0.0
    %1007 = vmatpush1.msra.mxu0 0.0
    %1008 = vmatprep.subr.mxu0 0.0
    %1009 = vmatpush1.msra.mxu0 0.0
    %1010 = vmatprep.subr.mxu0 0.0
    %1011 = vmatpush1.msra.mxu0 0.0
    %1012 = vmatprep.subr.mxu0 0.0
    %1013 = vmatpush1.msra.mxu0 0.0
    %1014 = vmatprep.subr.mxu0 0.0
    %1015 = vmatpush1.msra.mxu0 0.0
    %1016 = vmatprep.mubr.f32.mxu0 0.0
    %1017 = vmatmul.mubr.f32.gmra.mrb[0].mxu0 %v947
    %v1018 = vpop.f32.mrb[0].mxu0
    %v1019 = vadd.f32 0.0, %v1018
    %v1020 = vpop.f32.mrb[0].mxu0
    %1021 = vmatprep.mubr.f32.mxu0 0.0
    %1022 = vmatmul.mubr.f32.gmra.mrb[0].mxu0 %v950
    %v1023 = vpop.f32.mrb[0].mxu0
    %v1024 = vadd.f32 0.0, %v1023
    %v1025 = vpop.f32.mrb[0].mxu0
    %1026 = vdwg.mxu0
    %1029 = vrot.lane.b32.xlu0 %v1019, 8
    %v1030 = vpop.permute.xlu0 %1029
    %1031 = vrot.lane.b32.xlu0 %v1024, 8
    %v1032 = vpop.permute.xlu0 %1031
    %v1035 = vsel %vm569, %v932, %v1030
    %v1036 = vsel %vm569, %v937, %v1032
    %v1038 = vlaneseq
    %v1039 = vshrl.u32 %v1038, 7
    %v1040 = vsub.s32 0, %v1039
    %v1041 = vrot.slane %v584, %v1040
    %v1043 = vadd.f32 %v1035, %v1041
    %v1044 = vadd.f32 %v1036, %v1041
    %v1045 = vmax.f32 %v1043, 0.0
    %v1046 = vmax.f32 %v1044, 0.0
    %v1047 = vld [vmem:[#allocation9] sm:$0x1]
    %1048 = vrot.lane.b32.xlu0 %v658, 108
    %v1049 = vpop.permute.xlu0 %1048
    %1050 = vrot.lane.b32.xlu0 %v663, 108
    %v1051 = vpop.permute.xlu0 %1050
    %v1054 = vadd.f32 %v1045, %v1049
    %v1055 = vadd.f32 %v1046, %v1051
    %v1057 = vlaneseq
    %v1058 = vshrl.u32 %v1057, 7
    %v1059 = vsub.s32 0, %v1058
    %v1060 = vrot.slane %v1047, %v1059
    %v1062 = vadd.f32 %v1054, %v1060
    %v1063 = vadd.f32 %v1055, %v1060
    %v1064 = vld [vmem:[%s7] sm:$0xff]
    %v1065 = vld [vmem:[%s7 + $0x8] sm:$0xff]
    %v1066 = vld [vmem:[%s8] sm:$0x1]
    %v1068 = vsel %vm118, %v1062, 0
    %v1071 = vsel %vm118, %v1063, 0
    %1073 = vmatprep.subr.mxu0 0.0
    %1074 = vmatpush1.msra.mxu0 %v1064
    %1075 = vmatprep.subr.mxu0 0.0
    %1076 = vmatpush1.msra.mxu0 %v1065
    %1077 = vmatprep.subr.mxu0 0.0
    %1078 = vmatpush1.msra.mxu0 0.0
    %1079 = vmatprep.subr.mxu0 0.0
    %1080 = vmatpush1.msra.mxu0 0.0
    %1081 = vmatprep.subr.mxu0 0.0
    %1082 = vmatpush1.msra.mxu0 0.0
    %1083 = vmatprep.subr.mxu0 0.0
    %1084 = vmatpush1.msra.mxu0 0.0
    %1085 = vmatprep.subr.mxu0 0.0
    %1086 = vmatpush1.msra.mxu0 0.0
    %1087 = vmatprep.subr.mxu0 0.0
    %1088 = vmatpush1.msra.mxu0 0.0
    %1089 = vmatprep.subr.mxu0 0.0
    %1090 = vmatpush1.msra.mxu0 0.0
    %1091 = vmatprep.subr.mxu0 0.0
    %1092 = vmatpush1.msra.mxu0 0.0
    %1093 = vmatprep.subr.mxu0 0.0
    %1094 = vmatpush1.msra.mxu0 0.0
    %1095 = vmatprep.subr.mxu0 0.0
    %1096 = vmatpush1.msra.mxu0 0.0
    %1097 = vmatprep.subr.mxu0 0.0
    %1098 = vmatpush1.msra.mxu0 0.0
    %1099 = vmatprep.subr.mxu0 0.0
    %1100 = vmatpush1.msra.mxu0 0.0
    %1101 = vmatprep.subr.mxu0 0.0
    %1102 = vmatpush1.msra.mxu0 0.0
    %1103 = vmatprep.subr.mxu0 0.0
    %1104 = vmatpush1.msra.mxu0 0.0
    %1105 = vmatprep.subr.mxu0 0.0
    %1106 = vmatpush1.msra.mxu0 0.0
    %1107 = vmatprep.subr.mxu0 0.0
    %1108 = vmatpush1.msra.mxu0 0.0
    %1109 = vmatprep.subr.mxu0 0.0
    %1110 = vmatpush1.msra.mxu0 0.0
    %1111 = vmatprep.subr.mxu0 0.0
    %1112 = vmatpush1.msra.mxu0 0.0
    %1113 = vmatprep.subr.mxu0 0.0
    %1114 = vmatpush1.msra.mxu0 0.0
    %1115 = vmatprep.subr.mxu0 0.0
    %1116 = vmatpush1.msra.mxu0 0.0
    %1117 = vmatprep.subr.mxu0 0.0
    %1118 = vmatpush1.msra.mxu0 0.0
    %1119 = vmatprep.subr.mxu0 0.0
    %1120 = vmatpush1.msra.mxu0 0.0
    %1121 = vmatprep.subr.mxu0 0.0
    %1122 = vmatpush1.msra.mxu0 0.0
    %1123 = vmatprep.subr.mxu0 0.0
    %1124 = vmatpush1.msra.mxu0 0.0
    %1125 = vmatprep.subr.mxu0 0.0
    %1126 = vmatpush1.msra.mxu0 0.0
    %1127 = vmatprep.subr.mxu0 0.0
    %1128 = vmatpush1.msra.mxu0 0.0
    %1129 = vmatprep.subr.mxu0 0.0
    %1130 = vmatpush1.msra.mxu0 0.0
    %1131 = vmatprep.subr.mxu0 0.0
    %1132 = vmatpush1.msra.mxu0 0.0
    %1133 = vmatprep.subr.mxu0 0.0
    %1134 = vmatpush1.msra.mxu0 0.0
    %1135 = vmatprep.subr.mxu0 0.0
    %1136 = vmatpush1.msra.mxu0 0.0
    %1137 = vmatprep.mubr.f32.mxu0 0.0
    %1138 = vmatmul.mubr.f32.gmra.mrb[0].mxu0 %v1068
    %v1139 = vpop.f32.mrb[0].mxu0
    %v1140 = vadd.f32 0.0, %v1139
    %v1141 = vpop.f32.mrb[0].mxu0
    %1142 = vmatprep.mubr.f32.mxu0 0.0
    %1143 = vmatmul.mubr.f32.gmra.mrb[0].mxu0 %v1071
    %v1144 = vpop.f32.mrb[0].mxu0
    %v1145 = vadd.f32 0.0, %v1144
    %v1146 = vpop.f32.mrb[0].mxu0
    %1147 = vdwg.mxu0
    %1150 = vrot.lane.b32.xlu0 %v1140, 120
    %v1151 = vpop.permute.xlu0 %1150
    %1152 = vrot.lane.b32.xlu0 %v1145, 120
    %v1153 = vpop.permute.xlu0 %1152
    %1156 = vxpose.xlu0.b32.start [1/16] %v1151, 128
    %1157 = vxpose.xlu0.b32.cont [2/16] %v1153, 128
    %1158 = vxpose.xlu0.b32.cont [3/16] 0.0, 128
    %1159 = vxpose.xlu0.b32.cont [4/16] 0.0, 128
    %1160 = vxpose.xlu0.b32.cont [5/16] 0.0, 128
    %1161 = vxpose.xlu0.b32.cont [6/16] 0.0, 128
    %1162 = vxpose.xlu0.b32.cont [7/16] 0.0, 128
    %1163 = vxpose.xlu0.b32.cont [8/16] 0.0, 128
    %1164 = vxpose.xlu0.b32.cont [9/16] 0.0, 128
    %1165 = vxpose.xlu0.b32.cont [10/16] 0.0, 128
    %1166 = vxpose.xlu0.b32.cont [11/16] 0.0, 128
    %1167 = vxpose.xlu0.b32.cont [12/16] 0.0, 128
    %1168 = vxpose.xlu0.b32.cont [13/16] 0.0, 128
    %1169 = vxpose.xlu0.b32.cont [14/16] 0.0, 128
    %1170 = vxpose.xlu0.b32.cont [15/16] 0.0, 128
    %1171 = vxpose.xlu0.b32.end [16/16] 0.0, 128
    %v1172 = vpop.trf.xlu0
    %v1173 = vpop.trf.xlu0
    %v1174 = vpop.trf.xlu0
    %v1175 = vpop.trf.xlu0
    %v1176 = vpop.trf.xlu0
    %v1177 = vpop.trf.xlu0
    %v1178 = vpop.trf.xlu0
    %v1179 = vpop.trf.xlu0
    %v1180 = vpop.trf.xlu0
    %v1181 = vpop.trf.xlu0
    %v1182 = vpop.trf.xlu0
    %v1183 = vpop.trf.xlu0
    %v1184 = vpop.trf.xlu0
    %v1185 = vpop.trf.xlu0
    %v1186 = vpop.trf.xlu0
    %v1187 = vpop.trf.xlu0
    %v1188 = vlaneseq
    %v1189 = vshrl.u32 %v1188, 7
    %v1190 = vsub.s32 0, %v1189
    %v1191 = vrot.slane %v1172, %v1190
    %1193 = vbcast.lane.b32.xlu0 %v1191, 256
    %v1194 = vpop.permute.xlu0 %1193
    %s1196 = sor.u32 256, 8
    %1197 = vbcast.lane.b32.xlu0 %v1191, %s1196
    %v1198 = vpop.permute.xlu0 %1197
    %1199 = vrot.lane.b32.xlu0 %v1140, 119
    %v1200 = vpop.permute.xlu0 %1199
    %1201 = vrot.lane.b32.xlu0 %v1145, 119
    %v1202 = vpop.permute.xlu0 %1201
    %1205 = vxpose.xlu0.b32.start [1/16] %v1200, 128
    %1206 = vxpose.xlu0.b32.cont [2/16] %v1202, 128
    %1207 = vxpose.xlu0.b32.cont [3/16] 0.0, 128
    %1208 = vxpose.xlu0.b32.cont [4/16] 0.0, 128
    %1209 = vxpose.xlu0.b32.cont [5/16] 0.0, 128
    %1210 = vxpose.xlu0.b32.cont [6/16] 0.0, 128
    %1211 = vxpose.xlu0.b32.cont [7/16] 0.0, 128
    %1212 = vxpose.xlu0.b32.cont [8/16] 0.0, 128
    %1213 = vxpose.xlu0.b32.cont [9/16] 0.0, 128
    %1214 = vxpose.xlu0.b32.cont [10/16] 0.0, 128
    %1215 = vxpose.xlu0.b32.cont [11/16] 0.0, 128
    %1216 = vxpose.xlu0.b32.cont [12/16] 0.0, 128
    %1217 = vxpose.xlu0.b32.cont [13/16] 0.0, 128
    %1218 = vxpose.xlu0.b32.cont [14/16] 0.0, 128
    %1219 = vxpose.xlu0.b32.cont [15/16] 0.0, 128
    %1220 = vxpose.xlu0.b32.end [16/16] 0.0, 128
    %v1221 = vpop.trf.xlu0
    %v1222 = vpop.trf.xlu0
    %v1223 = vpop.trf.xlu0
    %v1224 = vpop.trf.xlu0
    %v1225 = vpop.trf.xlu0
    %v1226 = vpop.trf.xlu0
    %v1227 = vpop.trf.xlu0
    %v1228 = vpop.trf.xlu0
    %v1229 = vpop.trf.xlu0
    %v1230 = vpop.trf.xlu0
    %v1231 = vpop.trf.xlu0
    %v1232 = vpop.trf.xlu0
    %v1233 = vpop.trf.xlu0
    %v1234 = vpop.trf.xlu0
    %v1235 = vpop.trf.xlu0
    %v1236 = vpop.trf.xlu0
    %v1237 = vlaneseq
    %v1238 = vshrl.u32 %v1237, 7
    %v1239 = vsub.s32 0, %v1238
    %v1240 = vrot.slane %v1221, %v1239
    %v1241 = vadd.f32 %v1194, %v1240
    %v1242 = vadd.f32 %v1198, %v1240
    %v1243 = vmul.f32 %v1241, 0.2
    %v1244 = vmul.f32 %v1242, 0.2
    %v1245 = vmax.f32 %v1241, %v1243
    %v1246 = vmax.f32 %v1242, %v1244
    %v1247 = vadd.f32 %v1245, %v111
    %v1248 = vadd.f32 %v1246, %v112
    %v1249 = vsel %vm118, %v1247, -inf
    %1250 = vmax.xlane.f32.xlu0 %v1249
    %v1251 = vpop.xlane.xlu0 %1250
    %v1252 = vsel %vm118, %v1248, -inf
    %1253 = vmax.xlane.f32.xlu0 %v1252
    %v1254 = vpop.xlane.xlu0 %1253
    %v1255 = vsub.f32 %v1247, %v1251
    %v1256 = vsub.f32 %v1248, %v1254
    %v1257 = vmul.f32 %v1255, 1.442695
    %v1258 = vpow.pop %v1257
    %v1259 = vmul.f32 %v1256, 1.442695
    %v1260 = vpow.pop %v1259
    %v1261 = vsel %vm118, %v1258, 0.0
    %1262 = vadd.xlane.f32.xlu0 %v1261
    %v1263 = vpop.xlane.xlu0 %1262
    %v1264 = vsel %vm118, %v1260, 0.0
    %1265 = vadd.xlane.f32.xlu0 %v1264
    %v1266 = vpop.xlane.xlu0 %1265
    %v1267 = vrcp.pop %v1263
    %v1268 = vrcp.pop %v1266
    %v1269 = vmul.f32 %v1258, %v1267
    %v1270 = vmul.f32 %v1260, %v1268
    %v1272 = vlaneseq
    %v1273 = vshrl.u32 %v1272, 7
    %v1274 = vsub.s32 0, %v1273
    %v1275 = vrot.slane %v1066, %v1274
    %v1278 = vsel %vm118, %v1269, 0
    %v1281 = vsel %vm118, %v1270, 0
    %1283 = vmatprep.subr.mxu0 0.0
    %1284 = vmatpush1.msra.mxu0 %v1140
    %1285 = vmatprep.subr.mxu0 0.0
    %1286 = vmatpush1.msra.mxu0 %v1145
    %1287 = vmatprep.subr.mxu0 0.0
    %1288 = vmatpush1.msra.mxu0 0.0
    %1289 = vmatprep.subr.mxu0 0.0
    %1290 = vmatpush1.msra.mxu0 0.0
    %1291 = vmatprep.subr.mxu0 0.0
    %1292 = vmatpush1.msra.mxu0 0.0
    %1293 = vmatprep.subr.mxu0 0.0
    %1294 = vmatpush1.msra.mxu0 0.0
    %1295 = vmatprep.subr.mxu0 0.0
    %1296 = vmatpush1.msra.mxu0 0.0
    %1297 = vmatprep.subr.mxu0 0.0
    %1298 = vmatpush1.msra.mxu0 0.0
    %1299 = vmatprep.subr.mxu0 0.0
    %1300 = vmatpush1.msra.mxu0 0.0
    %1301 = vmatprep.subr.mxu0 0.0
    %1302 = vmatpush1.msra.mxu0 0.0
    %1303 = vmatprep.subr.mxu0 0.0
    %1304 = vmatpush1.msra.mxu0 0.0
    %1305 = vmatprep.subr.mxu0 0.0
    %1306 = vmatpush1.msra.mxu0 0.0
    %1307 = vmatprep.subr.mxu0 0.0
    %1308 = vmatpush1.msra.mxu0 0.0
    %1309 = vmatprep.subr.mxu0 0.0
    %1310 = vmatpush1.msra.mxu0 0.0
    %1311 = vmatprep.subr.mxu0 0.0
    %1312 = vmatpush1.msra.mxu0 0.0
    %1313 = vmatprep.subr.mxu0 0.0
    %1314 = vmatpush1.msra.mxu0 0.0
    %1315 = vmatprep.subr.mxu0 0.0
    %1316 = vmatpush1.msra.mxu0 0.0
    %1317 = vmatprep.subr.mxu0 0.0
    %1318 = vmatpush1.msra.mxu0 0.0
    %1319 = vmatprep.subr.mxu0 0.0
    %1320 = vmatpush1.msra.mxu0 0.0
    %1321 = vmatprep.subr.mxu0 0.0
    %1322 = vmatpush1.msra.mxu0 0.0
    %1323 = vmatprep.subr.mxu0 0.0
    %1324 = vmatpush1.msra.mxu0 0.0
    %1325 = vmatprep.subr.mxu0 0.0
    %1326 = vmatpush1.msra.mxu0 0.0
    %1327 = vmatprep.subr.mxu0 0.0
    %1328 = vmatpush1.msra.mxu0 0.0
    %1329 = vmatprep.subr.mxu0 0.0
    %1330 = vmatpush1.msra.mxu0 0.0
    %1331 = vmatprep.subr.mxu0 0.0
    %1332 = vmatpush1.msra.mxu0 0.0
    %1333 = vmatprep.subr.mxu0 0.0
    %1334 = vmatpush1.msra.mxu0 0.0
    %1335 = vmatprep.subr.mxu0 0.0
    %1336 = vmatpush1.msra.mxu0 0.0
    %1337 = vmatprep.subr.mxu0 0.0
    %1338 = vmatpush1.msra.mxu0 0.0
    %1339 = vmatprep.subr.mxu0 0.0
    %1340 = vmatpush1.msra.mxu0 0.0
    %1341 = vmatprep.subr.mxu0 0.0
    %1342 = vmatpush1.msra.mxu0 0.0
    %1343 = vmatprep.subr.mxu0 0.0
    %1344 = vmatpush1.msra.mxu0 0.0
    %1345 = vmatprep.subr.mxu0 0.0
    %1346 = vmatpush1.msra.mxu0 0.0
    %1347 = vmatprep.mubr.f32.mxu0 0.0
    %1348 = vmatmul.mubr.f32.gmra.mrb[0].mxu0 %v1278
    %v1349 = vpop.f32.mrb[0].mxu0
    %v1350 = vadd.f32 %v1275, %v1349
    %v1351 = vpop.f32.mrb[0].mxu0
    %1352 = vmatprep.mubr.f32.mxu0 0.0
    %1353 = vmatmul.mubr.f32.gmra.mrb[0].mxu0 %v1281
    %v1354 = vpop.f32.mrb[0].mxu0
    %v1355 = vadd.f32 %v1275, %v1354
    %v1356 = vpop.f32.mrb[0].mxu0
    %1357 = vdwg.mxu0
    %v1358 = vmax.f32 %v1350, 0.0
    %v1359 = vmax.f32 %v1355, 0.0
    %v1360 = vld [vmem:[%s9] sm:$0x1]
    %1361 = vrot.lane.b32.xlu0 %v1140, 118
    %v1362 = vpop.permute.xlu0 %1361
    %1363 = vrot.lane.b32.xlu0 %v1145, 118
    %v1364 = vpop.permute.xlu0 %1363
    %v1367 = vadd.f32 %v1358, %v1362
    %v1368 = vadd.f32 %v1359, %v1364
    %v1370 = vlaneseq
    %v1371 = vshrl.u32 %v1370, 7
    %v1372 = vsub.s32 0, %v1371
    %v1373 = vrot.slane %v1360, %v1372
    %v1375 = vadd.f32 %v1367, %v1373
    %v1376 = vadd.f32 %v1368, %v1373
    %v1377 = vld [vmem:[%s10] sm:$0xff]
    %v1378 = vld [vmem:[%s11] sm:$0x1]
    %v1380 = vlaneseq
    %v1381 = vshrl.u32 %v1380, 7
    %v1382 = vsub.s32 0, %v1381
    %v1383 = vrot.slane %v1378, %v1382
    %v1386 = vsel %vm569, %v1375, 0
    %v1389 = vsel %vm569, %v1376, 0
    %1391 = vmatprep.subr.mxu0 0.0
    %1392 = vmatpush1.msra.mxu0 %v1377
    %1393 = vmatprep.subr.mxu0 0.0
    %1394 = vmatpush1.msra.mxu0 0.0
    %1395 = vmatprep.subr.mxu0 0.0
    %1396 = vmatpush1.msra.mxu0 0.0
    %1397 = vmatprep.subr.mxu0 0.0
    %1398 = vmatpush1.msra.mxu0 0.0
    %1399 = vmatprep.subr.mxu0 0.0
    %1400 = vmatpush1.msra.mxu0 0.0
    %1401 = vmatprep.subr.mxu0 0.0
    %1402 = vmatpush1.msra.mxu0 0.0
    %1403 = vmatprep.subr.mxu0 0.0
    %1404 = vmatpush1.msra.mxu0 0.0
    %1405 = vmatprep.subr.mxu0 0.0
    %1406 = vmatpush1.msra.mxu0 0.0
    %1407 = vmatprep.subr.mxu0 0.0
    %1408 = vmatpush1.msra.mxu0 0.0
    %1409 = vmatprep.subr.mxu0 0.0
    %1410 = vmatpush1.msra.mxu0 0.0
    %1411 = vmatprep.subr.mxu0 0.0
    %1412 = vmatpush1.msra.mxu0 0.0
    %1413 = vmatprep.subr.mxu0 0.0
    %1414 = vmatpush1.msra.mxu0 0.0
    %1415 = vmatprep.subr.mxu0 0.0
    %1416 = vmatpush1.msra.mxu0 0.0
    %1417 = vmatprep.subr.mxu0 0.0
    %1418 = vmatpush1.msra.mxu0 0.0
    %1419 = vmatprep.subr.mxu0 0.0
    %1420 = vmatpush1.msra.mxu0 0.0
    %1421 = vmatprep.subr.mxu0 0.0
    %1422 = vmatpush1.msra.mxu0 0.0
    %1423 = vmatprep.subr.mxu0 0.0
    %1424 = vmatpush1.msra.mxu0 0.0
    %1425 = vmatprep.subr.mxu0 0.0
    %1426 = vmatpush1.msra.mxu0 0.0
    %1427 = vmatprep.subr.mxu0 0.0
    %1428 = vmatpush1.msra.mxu0 0.0
    %1429 = vmatprep.subr.mxu0 0.0
    %1430 = vmatpush1.msra.mxu0 0.0
    %1431 = vmatprep.subr.mxu0 0.0
    %1432 = vmatpush1.msra.mxu0 0.0
    %1433 = vmatprep.subr.mxu0 0.0
    %1434 = vmatpush1.msra.mxu0 0.0
    %1435 = vmatprep.subr.mxu0 0.0
    %1436 = vmatpush1.msra.mxu0 0.0
    %1437 = vmatprep.subr.mxu0 0.0
    %1438 = vmatpush1.msra.mxu0 0.0
    %1439 = vmatprep.subr.mxu0 0.0
    %1440 = vmatpush1.msra.mxu0 0.0
    %1441 = vmatprep.subr.mxu0 0.0
    %1442 = vmatpush1.msra.mxu0 0.0
    %1443 = vmatprep.subr.mxu0 0.0
    %1444 = vmatpush1.msra.mxu0 0.0
    %1445 = vmatprep.subr.mxu0 0.0
    %1446 = vmatpush1.msra.mxu0 0.0
    %1447 = vmatprep.subr.mxu0 0.0
    %1448 = vmatpush1.msra.mxu0 0.0
    %1449 = vmatprep.subr.mxu0 0.0
    %1450 = vmatpush1.msra.mxu0 0.0
    %1451 = vmatprep.subr.mxu0 0.0
    %1452 = vmatpush1.msra.mxu0 0.0
    %1453 = vmatprep.subr.mxu0 0.0
    %1454 = vmatpush1.msra.mxu0 0.0
    %1455 = vmatprep.mubr.f32.mxu0 0.0
    %1456 = vmatmul.mubr.f32.gmra.mrb[0].mxu0 %v1386
    %v1457 = vpop.f32.mrb[0].mxu0
    %v1458 = vadd.f32 %v1383, %v1457
    %v1459 = vpop.f32.mrb[0].mxu0
    %1460 = vmatprep.mubr.f32.mxu0 0.0
    %1461 = vmatmul.mubr.f32.gmra.mrb[0].mxu0 %v1389
    %v1462 = vpop.f32.mrb[0].mxu0
    %v1463 = vadd.f32 %v1383, %v1462
    %v1464 = vpop.f32.mrb[0].mxu0
    %1465 = vdwg.mxu0
    %v1466 = vsel %vm569, %v1458, -inf
    %1467 = vmax.xlane.f32.xlu0 %v1466
    %v1468 = vpop.xlane.xlu0 %1467
    %v1469 = vsel %vm569, %v1463, -inf
    %1470 = vmax.xlane.f32.xlu0 %v1469
    %v1471 = vpop.xlane.xlu0 %1470
    %v1472 = vsub.f32 %v1458, %v1468
    %v1473 = vsub.f32 %v1463, %v1471
    %v1474 = vmul.f32 %v1472, 1.442695
    %v1475 = vpow.pop %v1474
    %v1476 = vmul.f32 %v1473, 1.442695
    %v1477 = vpow.pop %v1476
    %v1478 = vsel %vm569, %v1475, 0.0
    %1479 = vadd.xlane.f32.xlu0 %v1478
    %v1480 = vpop.xlane.xlu0 %1479
    %v1481 = vsel %vm569, %v1477, 0.0
    %1482 = vadd.xlane.f32.xlu0 %v1481
    %v1483 = vpop.xlane.xlu0 %1482
    %v1484 = vlog2.pop %v1480
    %v1485 = vmul.f32 %v1484, 0.6931472
    %v1486 = vlog2.pop %v1483
    %v1487 = vmul.f32 %v1486, 0.6931472
    %v1488 = vadd.f32 %v1468, %v1485
    %v1489 = vadd.f32 %v1471, %v1487
    %v1490 = vsub.f32 %v1458, %v1488
    %v1491 = vsub.f32 %v1463, %v1489
    %1492 = vst.msk [vmem:[%s12] sm:$0xff] %vm569, %v1490
    %1493 = vst.msk [vmem:[%s12 + $0x8] sm:$0xff] %vm569, %v1491
    // Predicated region
    $region70: #{tpu_custom_call.1} parent=1 // pred_check
      _
    $region71: #{tpu_custom_call.1} parent=1 // pred_check_branch
      %1495 = sbr.rel (0) target = $region73
    $region72: #{tpu_custom_call.1} parent=1 // pred_region
      _
    $region73: #{tpu_custom_call.1} parent=1 // pred_fallthru
      _
    // Predicated region
    $region74: #{tpu_custom_call.1} parent=1 // pred_check
      _
    $region75: #{tpu_custom_call.1} parent=1 // pred_check_branch
      %1497 = sbr.rel (0) target = $region77
    $region76: #{tpu_custom_call.1} parent=1 // pred_region
      _
    $region77: #{tpu_custom_call.1} parent=1 // pred_fallthru
      _
    %1498 = vsyncpa [#allocation3], 1
    %1499 = vsyncpa [#allocation5], 1
    %1500 = vsyncpa [#allocation8], 1

</llo_original>
